<compile_context>
chip_gen: v6e
topology: v6e:2x2x1
jax: 0.10.0
libtpu: 0.0.40
codegen_flags: <defaults>
</compile_context>

<pallas_src>
import functools

import jax
import jax.numpy as jnp
from jax import lax
from jax.experimental import pallas as pl
from jax.experimental.pallas import tpu as pltpu

_HIGHEST = jax.lax.Precision.HIGHEST  # only used by the pure-JAX reference


def _round_up(x, m):
    return (x + m - 1) // m * m


# ---------------------------------------------------------------------------
# Fused Pallas kernel
# ---------------------------------------------------------------------------
def _fused_block_kernel(*refs, stride, th_out, H, W, expand, identity):
    if expand:
        (xp_ref, we_ref, se_ref, be_ref,
         wd_ref, sd_ref, bd_ref, wp_ref, sp_ref, bp_ref, *rest) = refs
    else:
        (xp_ref, wd_ref, sd_ref, bd_ref, wp_ref, sp_ref, bp_ref, *rest) = refs
    if identity:
        res_ref, o_ref, h_ref = rest
    else:
        o_ref, h_ref = rest

    t = pl.program_id(1)
    W_out = (W - 1) // stride + 1
    th_in = stride * (th_out - 1) + 3          # padded input rows needed (incl. halo)
    Wp = xp_ref.shape[2]                       # lane-alignment padded width (>= W+2)
    Cin_p = xp_ref.shape[3]
    Ch_p = h_ref.shape[2]

    row0 = t * (stride * th_out)               # first padded input row of this tile
    xt = xp_ref[0, pl.ds(row0, th_in), :, :]   # (th_in, Wp, Cin_p)

    # ---- 1x1 expand + folded BN + ReLU6 (skipped when expand_ratio == 1) ----
    if expand:
        xm = xt.reshape(th_in * Wp, Cin_p)
        h = jnp.dot(xm, we_ref[...], preferred_element_type=jnp.float32)
        h = jnp.clip(h * se_ref[...] + be_ref[...], 0.0, 6.0)
        h_ref[...] = h.reshape(th_in, Wp, Ch_p)
        # Re-impose the depthwise conv's zero padding at the image border:
        # expand+BN turned those zero-padded pixels into relu6(bias).
        zero_col = jnp.zeros((th_in, 1, Ch_p), jnp.float32)
        h_ref[:, 0:1, :] = zero_col
        h_ref[:, W + 1:W + 2, :] = zero_col

        @pl.when(row0 == 0)                    # tile containing the top image border
        def _():
            h_ref[0:1, :, :] = jnp.zeros((1, Wp, Ch_p), jnp.float32)

        @pl.when(row0 + th_in == H + 2)        # tile containing the bottom image border
        def _():
            h_ref[th_in - 1:th_in, :, :] = jnp.zeros((1, Wp, Ch_p), jnp.float32)
    else:
        h_ref[...] = xt                        # hidden == (already zero-padded) input

    # ---- 3x3 depthwise + folded BN + ReLU6 (stride applied via strided window reads) ----
    wdv = wd_ref[...]                          # (9, Ch_p)
    acc = jnp.zeros((th_out, W_out, Ch_p), jnp.float32)
    for ki in range(3):
        for kj in range(3):
            if stride == 1:
                tap = h_ref[pl.ds(ki, th_out), pl.ds(kj, W_out), :]
            else:
                tap = h_ref[pl.ds(ki, th_out, stride=stride),
                            pl.ds(kj, W_out, stride=stride), :]
            acc = acc + tap * wdv[3 * ki + kj:3 * ki + kj + 1, :]
    d = acc.reshape(th_out * W_out, Ch_p)
    d = jnp.clip(d * sd_ref[...] + bd_ref[...], 0.0, 6.0)

    # ---- 1x1 project + folded BN (+ fused residual) ----
    y = jnp.dot(d, wp_ref[...], preferred_element_type=jnp.float32)
    y = y * sp_ref[...] + bp_ref[...]
    if identity:
        y = y + res_ref[0]
    o_ref[0] = y


# ---------------------------------------------------------------------------
# Wrapper
# ---------------------------------------------------------------------------
def _pick_th_out(H_out, W_out, Wp, ch_p, stride, n_batch, budget=2 * 1024 * 1024):
    """Largest divisor of H_out whose hidden tile fits the VMEM budget, keeps the
    flattened output block 8-row aligned, and leaves >=4 grid steps when possible."""
    cands = [t for t in range(1, H_out + 1) if H_out % t == 0]

    def ok(t):
        th_in = stride * (t - 1) + 3
        fits = th_in * Wp * ch_p * 4 <= budget
        aligned = (t * W_out) % 8 == 0 or t == H_out
        return fits and aligned

    good = [t for t in cands if ok(t)] or [H_out]
    pref = [t for t in good if n_batch * (H_out // t) >= 4]
    return max(pref) if pref else max(good)


def inverted_residual(x_nchw, params, *, inp, oup, stride, expand_ratio):
    """Pallas forward pass matching torch InvertedResidual.forward (NCHW in/out)."""
    assert stride in (1, 2)
    hidden = int(round(inp * expand_ratio))
    expand = expand_ratio != 1
    identity = (stride == 1 and inp == oup)

    N, C, H, W = x_nchw.shape
    assert C == inp
    H_out = (H - 1) // stride + 1
    W_out = (W - 1) // stride + 1

    Cin_p = _round_up(inp, 128)
    Ch_p = _round_up(hidden, 128)
    Cout_p = _round_up(oup, 128)
    Wp = _round_up(W + 2, 8)

    x = jnp.transpose(x_nchw, (0, 2, 3, 1)).astype(jnp.float32)          # NCHW -> NHWC
    # Zero pad: 1 row/col of conv padding (+ alignment extra on the right), channels -> Cin_p.
    xp = jnp.pad(x, ((0, 0), (1, 1), (1, Wp - W - 1), (0, Cin_p - inp)))

    # Weights / folded BN, zero padded to lane-aligned channel counts.
    if expand:
        we = jnp.pad(params["w_exp"], ((0, Cin_p - inp), (0, Ch_p - hidden)))
        se = jnp.pad(params["s_exp"], (0, Ch_p - hidden)).reshape(1, Ch_p)
        be = jnp.pad(params["b_exp"], (0, Ch_p - hidden)).reshape(1, Ch_p)
    wd = jnp.pad(params["w_dw"].reshape(9, hidden), ((0, 0), (0, Ch_p - hidden)))
    sd = jnp.pad(params["s_dw"], (0, Ch_p - hidden)).reshape(1, Ch_p)
    bd = jnp.pad(params["b_dw"], (0, Ch_p - hidden)).reshape(1, Ch_p)
    wp = jnp.pad(params["w_proj"], ((0, Ch_p - hidden), (0, Cout_p - oup)))
    sp = jnp.pad(params["s_proj"], (0, Cout_p - oup)).reshape(1, Cout_p)
    bp = jnp.pad(params["b_proj"], (0, Cout_p - oup)).reshape(1, Cout_p)

    th_out = _pick_th_out(H_out, W_out, Wp, Ch_p, stride, N)
    n_t = H_out // th_out
    th_in = stride * (th_out - 1) + 3

    in_specs = [pl.BlockSpec((1, H + 2, Wp, Cin_p), lambda b, t: (b, 0, 0, 0))]
    args = [xp]
    if expand:
        in_specs += [pl.BlockSpec((Cin_p, Ch_p), lambda b, t: (0, 0)),
                     pl.BlockSpec((1, Ch_p), lambda b, t: (0, 0)),
                     pl.BlockSpec((1, Ch_p), lambda b, t: (0, 0))]
        args += [we, se, be]
    in_specs += [pl.BlockSpec((9, Ch_p), lambda b, t: (0, 0)),
                 pl.BlockSpec((1, Ch_p), lambda b, t: (0, 0)),
                 pl.BlockSpec((1, Ch_p), lambda b, t: (0, 0)),
                 pl.BlockSpec((Ch_p, Cout_p), lambda b, t: (0, 0)),
                 pl.BlockSpec((1, Cout_p), lambda b, t: (0, 0)),
                 pl.BlockSpec((1, Cout_p), lambda b, t: (0, 0))]
    args += [wd, sd, bd, wp, sp, bp]
    if identity:
        xr = jnp.pad(x, ((0, 0), (0, 0), (0, 0), (0, Cout_p - oup))).reshape(N, H * W, Cout_p)
        in_specs.append(pl.BlockSpec((1, th_out * W, Cout_p), lambda b, t: (b, t, 0)))
        args.append(xr)

    kern = functools.partial(_fused_block_kernel, stride=stride, th_out=th_out,
                             H=H, W=W, expand=expand, identity=identity)

    out = pl.pallas_call(
        kern,
        out_shape=jax.ShapeDtypeStruct((N, H_out * W_out, Cout_p), jnp.float32),
        grid_spec=pltpu.PrefetchScalarGridSpec(
            num_scalar_prefetch=0,
            grid=(N, n_t),
            in_specs=in_specs,
            out_specs=pl.BlockSpec((1, th_out * W_out, Cout_p), lambda b, t: (b, t, 0)),
            scratch_shapes=[pltpu.VMEM((th_in, Wp, Ch_p), jnp.float32)],
        ),
        compiler_params=pltpu.CompilerParams(
            dimension_semantics=("parallel", "parallel"),
            vmem_limit_bytes=32 * 1024 * 1024),
    )(*args)

    out = out[:, :, :oup].reshape(N, H_out, W_out, oup)                  # drop lane padding
    return jnp.transpose(out, (0, 3, 1, 2))                              # NHWC -> NCHW


# ---------------------------------------------------------------------------
# Deterministic parameter initialization (folded BN, inference mode)
# ---------------------------------------------------------------------------
def _fold_bn(gamma, beta, mean, var, eps=1e-5):
    scale = gamma / jnp.sqrt(var + eps)
    return scale, beta - mean * scale


def _rand_bn(key, c):
    k1, k2, k3, k4 = jax.random.split(key, 4)
    gamma = jax.random.uniform(k1, (c,), jnp.float32, 0.5, 1.5)
    beta = 0.1 * jax.random.normal(k2, (c,), jnp.float32)
    mean = 0.1 * jax.random.normal(k3, (c,), jnp.float32)
    var = jax.random.uniform(k4, (c,), jnp.float32, 0.5, 1.5)
    return _fold_bn(gamma, beta, mean, var)


def init_params(key, inp, oup, stride, expand_ratio):
    hidden = int(round(inp * expand_ratio))
    ks = jax.random.split(key, 6)
    p = {}
    if expand_ratio != 1:
        p["w_exp"] = 0.1 * jax.random.normal(ks[0], (inp, hidden), jnp.float32)
        p["s_exp"], p["b_exp"] = _rand_bn(ks[1], hidden)
    p["w_dw"] = 0.1 * jax.random.normal(ks[2], (3, 3, hidden), jnp.float32)
    p["s_dw"], p["b_dw"] = _rand_bn(ks[3], hidden)
    p["w_proj"] = 0.1 * jax.random.normal(ks[4], (hidden, oup), jnp.float32)
    p["s_proj"], p["b_proj"] = _rand_bn(ks[5], oup)
    return p


# ---------------------------------------------------------------------------
# Pure-JAX reference (same math, lax.conv) for verification
# ---------------------------------------------------------------------------
def ref_forward(x_nchw, p, *, inp, oup, stride, expand_ratio):
    identity = (stride == 1 and inp == oup)
    x = jnp.transpose(x_nchw, (0, 2, 3, 1)).astype(jnp.float32)
    y = x
    if expand_ratio != 1:
        y = jnp.einsum("nhwc,ck->nhwk", y, p["w_exp"], precision=_HIGHEST)
        y = jnp.clip(y * p["s_exp"] + p["b_exp"], 0.0, 6.0)
    C = y.shape[-1]
    y = lax.conv_general_dilated(
        y, p["w_dw"][:, :, None, :], window_strides=(stride, stride),
        padding=((1, 1), (1, 1)), dimension_numbers=("NHWC", "HWIO", "NHWC"),
        feature_group_count=C, precision=_HIGHEST)
    y = jnp.clip(y * p["s_dw"] + p["b_dw"], 0.0, 6.0)
    y = jnp.einsum("nhwc,ck->nhwk", y, p["w_proj"], precision=_HIGHEST)
    y = y * p["s_proj"] + p["b_proj"]
    if identity:
        y = y + x
    return jnp.transpose(y, (0, 3, 1, 2))


# ---------------------------------------------------------------------------
if __name__ == "__main__":
    key = jax.random.PRNGKey(0)
    kx, kp1, kp2 = jax.random.split(key, 3)

    x = jax.random.normal(kx, (2, 4, 16, 16), jnp.float32)   # NCHW like PyTorch

    # Config A: expand_ratio=6, stride=1, inp==oup -> identity (residual) branch
    cfg_a = dict(inp=4, oup=4, stride=1, expand_ratio=6)
    params_a = init_params(kp1, **cfg_a)
    out_a = jax.block_until_ready(inverted_residual(x, params_a, **cfg_a))
    ref_a = ref_forward(x, params_a, **cfg_a)
    assert out_a.shape == (2, 4, 16, 16)
    assert jnp.allclose(out_a, ref_a, atol=1e-2, rtol=1e-2)

    # Config B: expand_ratio=1, stride=2, inp!=oup -> no expand conv, no residual
    cfg_b = dict(inp=4, oup=8, stride=2, expand_ratio=1)
    params_b = init_params(kp2, **cfg_b)
    out_b = jax.block_until_ready(inverted_residual(x, params_b, **cfg_b))
    ref_b = ref_forward(x, params_b, **cfg_b)
    assert out_b.shape == (2, 8, 8, 8)
    assert jnp.allclose(out_b, ref_b, atol=1e-2, rtol=1e-2)

    print("KERNEL_OK")
</pallas_src>

<mosaic_0001>
module attributes {stable_mosaic.version = 11 : i64} {
  func.func @_fused_block_kernel(%arg0: i32, %arg1: i32, %arg2: memref<1x18x24x128xf32, #tpu.memory_space<vmem>>, %arg3: memref<128x128xf32, #tpu.memory_space<vmem>>, %arg4: memref<1x128xf32, #tpu.memory_space<vmem>>, %arg5: memref<1x128xf32, #tpu.memory_space<vmem>>, %arg6: memref<9x128xf32, #tpu.memory_space<vmem>>, %arg7: memref<1x128xf32, #tpu.memory_space<vmem>>, %arg8: memref<1x128xf32, #tpu.memory_space<vmem>>, %arg9: memref<128x128xf32, #tpu.memory_space<vmem>>, %arg10: memref<1x128xf32, #tpu.memory_space<vmem>>, %arg11: memref<1x128xf32, #tpu.memory_space<vmem>>, %arg12: memref<1x128x128xf32, #tpu.memory_space<vmem>>, %arg13: memref<1x128x128xf32, #tpu.memory_space<vmem>>, %arg14: memref<10x24x128xf32, #tpu.memory_space<vmem>>) attributes {dimension_semantics = [#tpu.dimension_semantics<parallel>, #tpu.dimension_semantics<parallel>], iteration_bounds = array<i64: 2, 2>, scalar_prefetch = 0 : i64, scratch_operands = 1 : i64, tpu.core_type = #tpu.core_type<tc>, window_params = [{transform_indices = @transform_0, window_bounds = array<i64: 1, 18, 24, 128>}, {pipeline_mode = #tpu.pipeline_mode<synchronous>, transform_indices = @transform_1, window_bounds = array<i64: 128, 128>}, {pipeline_mode = #tpu.pipeline_mode<synchronous>, transform_indices = @transform_2, window_bounds = array<i64: 1, 128>}, {pipeline_mode = #tpu.pipeline_mode<synchronous>, transform_indices = @transform_3, window_bounds = array<i64: 1, 128>}, {pipeline_mode = #tpu.pipeline_mode<synchronous>, transform_indices = @transform_4, window_bounds = array<i64: 9, 128>}, {pipeline_mode = #tpu.pipeline_mode<synchronous>, transform_indices = @transform_5, window_bounds = array<i64: 1, 128>}, {pipeline_mode = #tpu.pipeline_mode<synchronous>, transform_indices = @transform_6, window_bounds = array<i64: 1, 128>}, {pipeline_mode = #tpu.pipeline_mode<synchronous>, transform_indices = @transform_7, window_bounds = array<i64: 128, 128>}, {pipeline_mode = #tpu.pipeline_mode<synchronous>, transform_indices = @transform_8, window_bounds = array<i64: 1, 128>}, {pipeline_mode = #tpu.pipeline_mode<synchronous>, transform_indices = @transform_9, window_bounds = array<i64: 1, 128>}, {transform_indices = @transform_10, window_bounds = array<i64: 1, 128, 128>}, {transform_indices = @transform_11, window_bounds = array<i64: 1, 128, 128>}]} {
    %c8_i32 = arith.constant 8 : i32
    %0 = arith.muli %arg1, %c8_i32 : i32
    %c0 = arith.constant 0 : index
    %1 = arith.index_cast %0 : i32 to index
    %c0_0 = arith.constant 0 : index
    %c0_1 = arith.constant 0 : index
    %2 = vector.load %arg2[%c0, %1, %c0_0, %c0_1] : memref<1x18x24x128xf32, #tpu.memory_space<vmem>>, vector<1x10x24x128xf32>
    %3 = vector.shape_cast %2 : vector<1x10x24x128xf32> to vector<10x24x128xf32>
    %4 = vector.shape_cast %3 : vector<10x24x128xf32> to vector<240x128xf32>
    %c0_2 = arith.constant 0 : index
    %c0_3 = arith.constant 0 : index
    %5 = vector.load %arg3[%c0_2, %c0_3] : memref<128x128xf32, #tpu.memory_space<vmem>>, vector<128x128xf32>
    %cst = arith.constant dense<0.000000e+00> : vector<240x128xf32>
    %6 = tpu.matmul %4, %5, %cst {dimension_numbers = #tpu.dot_dimension_numbers<[1], [0], [0], [1], [0, 0, 1, 1], [], []>} : vector<240x128xf32>, vector<128x128xf32>, vector<240x128xf32> -> vector<240x128xf32>
    %c0_4 = arith.constant 0 : index
    %c0_5 = arith.constant 0 : index
    %7 = vector.load %arg4[%c0_4, %c0_5] : memref<1x128xf32, #tpu.memory_space<vmem>>, vector<1x128xf32>
    %8 = vector.broadcast %7 : vector<1x128xf32> to vector<240x128xf32>
    %9 = arith.mulf %6, %8 : vector<240x128xf32>
    %c0_6 = arith.constant 0 : index
    %c0_7 = arith.constant 0 : index
    %10 = vector.load %arg5[%c0_6, %c0_7] : memref<1x128xf32, #tpu.memory_space<vmem>>, vector<1x128xf32>
    %11 = vector.broadcast %10 : vector<1x128xf32> to vector<240x128xf32>
    %12 = arith.addf %9, %11 : vector<240x128xf32>
    %cst_8 = arith.constant 0.000000e+00 : f32
    %cst_9 = arith.constant 6.000000e+00 : f32
    %13 = vector.broadcast %cst_8 : f32 to vector<240x128xf32>
    %14 = arith.maximumf %13, %12 : vector<240x128xf32>
    %15 = vector.broadcast %cst_9 : f32 to vector<240x128xf32>
    %16 = arith.minimumf %15, %14 : vector<240x128xf32>
    %17 = vector.shape_cast %16 : vector<240x128xf32> to vector<10x24x128xf32>
    %c0_10 = arith.constant 0 : index
    %c0_11 = arith.constant 0 : index
    %c0_12 = arith.constant 0 : index
    %18 = vector.load %arg14[%c0_10, %c0_11, %c0_12] : memref<10x24x128xf32, #tpu.memory_space<vmem>>, vector<10x24x128xf32>
    tpu.vector_store %arg14[%c0_10, %c0_11, %c0_12], %17 {strides = array<i32>} : memref<10x24x128xf32, #tpu.memory_space<vmem>>, vector<10x24x128xf32>,
    %cst_13 = arith.constant 0.000000e+00 : f32
    %19 = vector.broadcast %cst_13 : f32 to vector<10x1x128xf32>
    %c0_14 = arith.constant 0 : index
    %c0_15 = arith.constant 0 : index
    %c0_16 = arith.constant 0 : index
    %20 = vector.load %arg14[%c0_14, %c0_15, %c0_16] : memref<10x24x128xf32, #tpu.memory_space<vmem>>, vector<10x1x128xf32>
    tpu.vector_store %arg14[%c0_14, %c0_15, %c0_16], %19 {strides = array<i32>} : memref<10x24x128xf32, #tpu.memory_space<vmem>>, vector<10x1x128xf32>,
    %c0_17 = arith.constant 0 : index
    %c17 = arith.constant 17 : index
    %c0_18 = arith.constant 0 : index
    %21 = vector.load %arg14[%c0_17, %c17, %c0_18] : memref<10x24x128xf32, #tpu.memory_space<vmem>>, vector<10x1x128xf32>
    tpu.vector_store %arg14[%c0_17, %c17, %c0_18], %19 {strides = array<i32>} : memref<10x24x128xf32, #tpu.memory_space<vmem>>, vector<10x1x128xf32>,
    %c0_i32 = arith.constant 0 : i32
    %22 = arith.cmpi eq, %0, %c0_i32 : i32
    %23 = arith.extui %22 : i1 to i32
    %c0_i32_19 = arith.constant 0 : i32
    %24 = arith.cmpi ne, %23, %c0_i32_19 : i32
    scf.if %24 {
      %cst_68 = arith.constant 0.000000e+00 : f32
      %110 = vector.broadcast %cst_68 : f32 to vector<1x24x128xf32>
      %c0_69 = arith.constant 0 : index
      %c0_70 = arith.constant 0 : index
      %c0_71 = arith.constant 0 : index
      %111 = vector.load %arg14[%c0_69, %c0_70, %c0_71] : memref<10x24x128xf32, #tpu.memory_space<vmem>>, vector<1x24x128xf32>
      tpu.vector_store %arg14[%c0_69, %c0_70, %c0_71], %110 {strides = array<i32>} : memref<10x24x128xf32, #tpu.memory_space<vmem>>, vector<1x24x128xf32>,
    } else {
    }
    %c10_i32 = arith.constant 10 : i32
    %25 = arith.addi %0, %c10_i32 : i32
    %c18_i32 = arith.constant 18 : i32
    %26 = arith.cmpi eq, %25, %c18_i32 : i32
    %27 = arith.extui %26 : i1 to i32
    %c0_i32_20 = arith.constant 0 : i32
    %28 = arith.cmpi ne, %27, %c0_i32_20 : i32
    scf.if %28 {
      %cst_68 = arith.constant 0.000000e+00 : f32
      %110 = vector.broadcast %cst_68 : f32 to vector<1x24x128xf32>
      %c9 = arith.constant 9 : index
      %c0_69 = arith.constant 0 : index
      %c0_70 = arith.constant 0 : index
      %111 = vector.load %arg14[%c9, %c0_69, %c0_70] : memref<10x24x128xf32, #tpu.memory_space<vmem>>, vector<1x24x128xf32>
      tpu.vector_store %arg14[%c9, %c0_69, %c0_70], %110 {strides = array<i32>} : memref<10x24x128xf32, #tpu.memory_space<vmem>>, vector<1x24x128xf32>,
    } else {
    }
    %c0_21 = arith.constant 0 : index
    %c0_22 = arith.constant 0 : index
    %29 = vector.load %arg6[%c0_21, %c0_22] : memref<9x128xf32, #tpu.memory_space<vmem>>, vector<9x128xf32>
    %cst_23 = arith.constant 0.000000e+00 : f32
    %30 = vector.broadcast %cst_23 : f32 to vector<8x16x128xf32>
    %c0_24 = arith.constant 0 : index
    %c0_25 = arith.constant 0 : index
    %c0_26 = arith.constant 0 : index
    %31 = vector.load %arg14[%c0_24, %c0_25, %c0_26] : memref<10x24x128xf32, #tpu.memory_space<vmem>>, vector<8x16x128xf32>
    %32 = vector.extract_strided_slice %29 {offsets = [0, 0], sizes = [1, 128], strides = [1, 1]} : vector<9x128xf32> to vector<1x128xf32>
    %33 = vector.shape_cast %32 : vector<1x128xf32> to vector<1x1x128xf32>
    %34 = vector.broadcast %33 : vector<1x1x128xf32> to vector<8x16x128xf32>
    %35 = arith.mulf %31, %34 : vector<8x16x128xf32>
    %36 = arith.addf %30, %35 : vector<8x16x128xf32>
    %c0_27 = arith.constant 0 : index
    %c1 = arith.constant 1 : index
    %c0_28 = arith.constant 0 : index
    %37 = vector.load %arg14[%c0_27, %c1, %c0_28] : memref<10x24x128xf32, #tpu.memory_space<vmem>>, vector<8x16x128xf32>
    %38 = vector.extract_strided_slice %29 {offsets = [1, 0], sizes = [1, 128], strides = [1, 1]} : vector<9x128xf32> to vector<1x128xf32>
    %39 = vector.shape_cast %38 : vector<1x128xf32> to vector<1x1x128xf32>
    %40 = vector.broadcast %39 : vector<1x1x128xf32> to vector<8x16x128xf32>
    %41 = arith.mulf %37, %40 : vector<8x16x128xf32>
    %42 = arith.addf %36, %41 : vector<8x16x128xf32>
    %c0_29 = arith.constant 0 : index
    %c2 = arith.constant 2 : index
    %c0_30 = arith.constant 0 : index
    %43 = vector.load %arg14[%c0_29, %c2, %c0_30] : memref<10x24x128xf32, #tpu.memory_space<vmem>>, vector<8x16x128xf32>
    %44 = vector.extract_strided_slice %29 {offsets = [2, 0], sizes = [1, 128], strides = [1, 1]} : vector<9x128xf32> to vector<1x128xf32>
    %45 = vector.shape_cast %44 : vector<1x128xf32> to vector<1x1x128xf32>
    %46 = vector.broadcast %45 : vector<1x1x128xf32> to vector<8x16x128xf32>
    %47 = arith.mulf %43, %46 : vector<8x16x128xf32>
    %48 = arith.addf %42, %47 : vector<8x16x128xf32>
    %c1_31 = arith.constant 1 : index
    %c0_32 = arith.constant 0 : index
    %c0_33 = arith.constant 0 : index
    %49 = vector.load %arg14[%c1_31, %c0_32, %c0_33] : memref<10x24x128xf32, #tpu.memory_space<vmem>>, vector<8x16x128xf32>
    %50 = vector.extract_strided_slice %29 {offsets = [3, 0], sizes = [1, 128], strides = [1, 1]} : vector<9x128xf32> to vector<1x128xf32>
    %51 = vector.shape_cast %50 : vector<1x128xf32> to vector<1x1x128xf32>
    %52 = vector.broadcast %51 : vector<1x1x128xf32> to vector<8x16x128xf32>
    %53 = arith.mulf %49, %52 : vector<8x16x128xf32>
    %54 = arith.addf %48, %53 : vector<8x16x128xf32>
    %c1_34 = arith.constant 1 : index
    %c1_35 = arith.constant 1 : index
    %c0_36 = arith.constant 0 : index
    %55 = vector.load %arg14[%c1_34, %c1_35, %c0_36] : memref<10x24x128xf32, #tpu.memory_space<vmem>>, vector<8x16x128xf32>
    %56 = vector.extract_strided_slice %29 {offsets = [4, 0], sizes = [1, 128], strides = [1, 1]} : vector<9x128xf32> to vector<1x128xf32>
    %57 = vector.shape_cast %56 : vector<1x128xf32> to vector<1x1x128xf32>
    %58 = vector.broadcast %57 : vector<1x1x128xf32> to vector<8x16x128xf32>
    %59 = arith.mulf %55, %58 : vector<8x16x128xf32>
    %60 = arith.addf %54, %59 : vector<8x16x128xf32>
    %c1_37 = arith.constant 1 : index
    %c2_38 = arith.constant 2 : index
    %c0_39 = arith.constant 0 : index
    %61 = vector.load %arg14[%c1_37, %c2_38, %c0_39] : memref<10x24x128xf32, #tpu.memory_space<vmem>>, vector<8x16x128xf32>
    %62 = vector.extract_strided_slice %29 {offsets = [5, 0], sizes = [1, 128], strides = [1, 1]} : vector<9x128xf32> to vector<1x128xf32>
    %63 = vector.shape_cast %62 : vector<1x128xf32> to vector<1x1x128xf32>
    %64 = vector.broadcast %63 : vector<1x1x128xf32> to vector<8x16x128xf32>
    %65 = arith.mulf %61, %64 : vector<8x16x128xf32>
    %66 = arith.addf %60, %65 : vector<8x16x128xf32>
    %c2_40 = arith.constant 2 : index
    %c0_41 = arith.constant 0 : index
    %c0_42 = arith.constant 0 : index
    %67 = vector.load %arg14[%c2_40, %c0_41, %c0_42] : memref<10x24x128xf32, #tpu.memory_space<vmem>>, vector<8x16x128xf32>
    %68 = vector.extract_strided_slice %29 {offsets = [6, 0], sizes = [1, 128], strides = [1, 1]} : vector<9x128xf32> to vector<1x128xf32>
    %69 = vector.shape_cast %68 : vector<1x128xf32> to vector<1x1x128xf32>
    %70 = vector.broadcast %69 : vector<1x1x128xf32> to vector<8x16x128xf32>
    %71 = arith.mulf %67, %70 : vector<8x16x128xf32>
    %72 = arith.addf %66, %71 : vector<8x16x128xf32>
    %c2_43 = arith.constant 2 : index
    %c1_44 = arith.constant 1 : index
    %c0_45 = arith.constant 0 : index
    %73 = vector.load %arg14[%c2_43, %c1_44, %c0_45] : memref<10x24x128xf32, #tpu.memory_space<vmem>>, vector<8x16x128xf32>
    %74 = vector.extract_strided_slice %29 {offsets = [7, 0], sizes = [1, 128], strides = [1, 1]} : vector<9x128xf32> to vector<1x128xf32>
    %75 = vector.shape_cast %74 : vector<1x128xf32> to vector<1x1x128xf32>
    %76 = vector.broadcast %75 : vector<1x1x128xf32> to vector<8x16x128xf32>
    %77 = arith.mulf %73, %76 : vector<8x16x128xf32>
    %78 = arith.addf %72, %77 : vector<8x16x128xf32>
    %c2_46 = arith.constant 2 : index
    %c2_47 = arith.constant 2 : index
    %c0_48 = arith.constant 0 : index
    %79 = vector.load %arg14[%c2_46, %c2_47, %c0_48] : memref<10x24x128xf32, #tpu.memory_space<vmem>>, vector<8x16x128xf32>
    %80 = vector.extract_strided_slice %29 {offsets = [8, 0], sizes = [1, 128], strides = [1, 1]} : vector<9x128xf32> to vector<1x128xf32>
    %81 = vector.shape_cast %80 : vector<1x128xf32> to vector<1x1x128xf32>
    %82 = vector.broadcast %81 : vector<1x1x128xf32> to vector<8x16x128xf32>
    %83 = arith.mulf %79, %82 : vector<8x16x128xf32>
    %84 = arith.addf %78, %83 : vector<8x16x128xf32>
    %85 = vector.shape_cast %84 : vector<8x16x128xf32> to vector<128x128xf32>
    %c0_49 = arith.constant 0 : index
    %c0_50 = arith.constant 0 : index
    %86 = vector.load %arg7[%c0_49, %c0_50] : memref<1x128xf32, #tpu.memory_space<vmem>>, vector<1x128xf32>
    %87 = vector.broadcast %86 : vector<1x128xf32> to vector<128x128xf32>
    %88 = arith.mulf %85, %87 : vector<128x128xf32>
    %c0_51 = arith.constant 0 : index
    %c0_52 = arith.constant 0 : index
    %89 = vector.load %arg8[%c0_51, %c0_52] : memref<1x128xf32, #tpu.memory_space<vmem>>, vector<1x128xf32>
    %90 = vector.broadcast %89 : vector<1x128xf32> to vector<128x128xf32>
    %91 = arith.addf %88, %90 : vector<128x128xf32>
    %cst_53 = arith.constant 0.000000e+00 : f32
    %cst_54 = arith.constant 6.000000e+00 : f32
    %92 = vector.broadcast %cst_53 : f32 to vector<128x128xf32>
    %93 = arith.maximumf %92, %91 : vector<128x128xf32>
    %94 = vector.broadcast %cst_54 : f32 to vector<128x128xf32>
    %95 = arith.minimumf %94, %93 : vector<128x128xf32>
    %c0_55 = arith.constant 0 : index
    %c0_56 = arith.constant 0 : index
    %96 = vector.load %arg9[%c0_55, %c0_56] : memref<128x128xf32, #tpu.memory_space<vmem>>, vector<128x128xf32>
    %cst_57 = arith.constant dense<0.000000e+00> : vector<128x128xf32>
    %97 = tpu.matmul %95, %96, %cst_57 {dimension_numbers = #tpu.dot_dimension_numbers<[1], [0], [0], [1], [0, 0, 1, 1], [], []>} : vector<128x128xf32>, vector<128x128xf32>, vector<128x128xf32> -> vector<128x128xf32>
    %c0_58 = arith.constant 0 : index
    %c0_59 = arith.constant 0 : index
    %98 = vector.load %arg10[%c0_58, %c0_59] : memref<1x128xf32, #tpu.memory_space<vmem>>, vector<1x128xf32>
    %99 = vector.broadcast %98 : vector<1x128xf32> to vector<128x128xf32>
    %100 = arith.mulf %97, %99 : vector<128x128xf32>
    %c0_60 = arith.constant 0 : index
    %c0_61 = arith.constant 0 : index
    %101 = vector.load %arg11[%c0_60, %c0_61] : memref<1x128xf32, #tpu.memory_space<vmem>>, vector<1x128xf32>
    %102 = vector.broadcast %101 : vector<1x128xf32> to vector<128x128xf32>
    %103 = arith.addf %100, %102 : vector<128x128xf32>
    %c0_62 = arith.constant 0 : index
    %c0_63 = arith.constant 0 : index
    %c0_64 = arith.constant 0 : index
    %104 = vector.load %arg12[%c0_62, %c0_63, %c0_64] : memref<1x128x128xf32, #tpu.memory_space<vmem>>, vector<1x128x128xf32>
    %105 = vector.shape_cast %104 : vector<1x128x128xf32> to vector<128x128xf32>
    %106 = arith.addf %103, %105 : vector<128x128xf32>
    %c0_65 = arith.constant 0 : index
    %c0_66 = arith.constant 0 : index
    %c0_67 = arith.constant 0 : index
    %107 = vector.load %arg13[%c0_65, %c0_66, %c0_67] : memref<1x128x128xf32, #tpu.memory_space<vmem>>, vector<1x128x128xf32>
    %108 = vector.shape_cast %107 : vector<1x128x128xf32> to vector<128x128xf32>
    %109 = vector.shape_cast %106 : vector<128x128xf32> to vector<1x128x128xf32>
    tpu.vector_store %arg13[%c0_65, %c0_66, %c0_67], %109 {strides = array<i32>} : memref<1x128x128xf32, #tpu.memory_space<vmem>>, vector<1x128x128xf32>,
    return
  }
  func.func @transform_0(%arg0: i32, %arg1: i32) -> (i32, i32, i32, i32) {
    %c0_i32 = arith.constant 0 : i32
    %c0_i32_0 = arith.constant 0 : i32
    %c0_i32_1 = arith.constant 0 : i32
    %c0_i32_2 = arith.constant 0 : i32
    return %arg0, %c0_i32, %c0_i32_0, %c0_i32_1 : i32, i32, i32, i32
  }
  func.func @transform_1(%arg0: i32, %arg1: i32) -> (i32, i32) {
    %c0_i32 = arith.constant 0 : i32
    %c0_i32_0 = arith.constant 0 : i32
    %c0_i32_1 = arith.constant 0 : i32
    return %c0_i32, %c0_i32_0 : i32, i32
  }
  func.func @transform_2(%arg0: i32, %arg1: i32) -> (i32, i32) {
    %c0_i32 = arith.constant 0 : i32
    %c0_i32_0 = arith.constant 0 : i32
    %c0_i32_1 = arith.constant 0 : i32
    return %c0_i32, %c0_i32_0 : i32, i32
  }
  func.func @transform_3(%arg0: i32, %arg1: i32) -> (i32, i32) {
    %c0_i32 = arith.constant 0 : i32
    %c0_i32_0 = arith.constant 0 : i32
    %c0_i32_1 = arith.constant 0 : i32
    return %c0_i32, %c0_i32_0 : i32, i32
  }
  func.func @transform_4(%arg0: i32, %arg1: i32) -> (i32, i32) {
    %c0_i32 = arith.constant 0 : i32
    %c0_i32_0 = arith.constant 0 : i32
    %c0_i32_1 = arith.constant 0 : i32
    return %c0_i32, %c0_i32_0 : i32, i32
  }
  func.func @transform_5(%arg0: i32, %arg1: i32) -> (i32, i32) {
    %c0_i32 = arith.constant 0 : i32
    %c0_i32_0 = arith.constant 0 : i32
    %c0_i32_1 = arith.constant 0 : i32
    return %c0_i32, %c0_i32_0 : i32, i32
  }
  func.func @transform_6(%arg0: i32, %arg1: i32) -> (i32, i32) {
    %c0_i32 = arith.constant 0 : i32
    %c0_i32_0 = arith.constant 0 : i32
    %c0_i32_1 = arith.constant 0 : i32
    return %c0_i32, %c0_i32_0 : i32, i32
  }
  func.func @transform_7(%arg0: i32, %arg1: i32) -> (i32, i32) {
    %c0_i32 = arith.constant 0 : i32
    %c0_i32_0 = arith.constant 0 : i32
    %c0_i32_1 = arith.constant 0 : i32
    return %c0_i32, %c0_i32_0 : i32, i32
  }
  func.func @transform_8(%arg0: i32, %arg1: i32) -> (i32, i32) {
    %c0_i32 = arith.constant 0 : i32
    %c0_i32_0 = arith.constant 0 : i32
    %c0_i32_1 = arith.constant 0 : i32
    return %c0_i32, %c0_i32_0 : i32, i32
  }
  func.func @transform_9(%arg0: i32, %arg1: i32) -> (i32, i32) {
    %c0_i32 = arith.constant 0 : i32
    %c0_i32_0 = arith.constant 0 : i32
    %c0_i32_1 = arith.constant 0 : i32
    return %c0_i32, %c0_i32_0 : i32, i32
  }
  func.func @transform_10(%arg0: i32, %arg1: i32) -> (i32, i32, i32) {
    %c0_i32 = arith.constant 0 : i32
    %c0_i32_0 = arith.constant 0 : i32
    return %arg0, %arg1, %c0_i32 : i32, i32, i32
  }
  func.func @transform_11(%arg0: i32, %arg1: i32) -> (i32, i32, i32) {
    %c0_i32 = arith.constant 0 : i32
    %c0_i32_0 = arith.constant 0 : i32
    return %arg0, %arg1, %c0_i32 : i32, i32, i32
  }
}

</mosaic_0001>

<llo_original>
// kernel: tpu_custom_call.1
$region0: #{tpu_custom_call.1}
  #allocation0 [shape = 'u32[]', space=smem, size = 0x4, offset = 0x4, fixed_abs, tag = 'smem constant byte address 0x4 - core index']
  #allocation1 [shape = 'u32[144,128]{1,0:T(1,128)}', space=vmem, size = 0x12000, scoped, tag = 'internal scratch']
  #allocation2 [shape = 'f32[10,24,128]{2,1,0:T(8,128)}', space=vmem, size = 0x1e000, scoped, tag = 'scratch operand']
  %s0 = inlined_call_operand.hbm [shape: f32[2,18,24,128], index: 0, kind: input, shape index: {}]
  %s1 = inlined_call_operand.hbm [shape: f32[128,128], index: 1, kind: input, shape index: {}]
  %s2 = inlined_call_operand.vmem [shape: f32[1,128], index: 2, kind: input, shape index: {}]
  %s3 = inlined_call_operand.vmem [shape: f32[1,128], index: 3, kind: input, shape index: {}]
  %s4 = inlined_call_operand.hbm [shape: f32[9,128], index: 4, kind: input, shape index: {}]
  %s5 = inlined_call_operand.vmem [shape: f32[1,128], index: 5, kind: input, shape index: {}]
  %s6 = inlined_call_operand.vmem [shape: f32[1,128], index: 6, kind: input, shape index: {}]
  %s7 = inlined_call_operand.hbm [shape: f32[128,128], index: 7, kind: input, shape index: {}]
  %s8 = inlined_call_operand.vmem [shape: f32[1,128], index: 8, kind: input, shape index: {}]
  %s9 = inlined_call_operand.vmem [shape: f32[1,128], index: 9, kind: input, shape index: {}]
  %s10 = inlined_call_operand.hbm [shape: f32[2,256,128], index: 10, kind: input, shape index: {}]
  %s11 = inlined_call_operand.hbm [shape: f32[2,256,128], index: 11, kind: output, shape index: {}]
  %s12 = sld [smem:[#allocation0]]
  $region105: #{tpu_custom_call.1} parent=0
    _
  %s14 = ssub.s32 1, %s12
  %s15 = scalar_select 0, %s14, %s12
  $region1: #{tpu_custom_call.1} parent=0
    #allocation3 [shape = 'u8[442368]{0}', space=vmem, size = 0x6c000, scoped, tag = 'input window, operand 0']
    #allocation4 [shape = 's32[2]{0}', space=sflag, size = 0x8, scoped, tag = 'scoped memory for tpu_custom_call.1']
    #allocation5 [shape = 's32[2]{0}', space=sflag, size = 0x8, scoped, tag = 'scoped memory for tpu_custom_call.1']
    #allocation6 [shape = 'u8[65536]{0}', space=vmem, size = 0x10000, scoped, tag = 'input window, operand 1, single buffered']
    #allocation7 [shape = 's32[1]{0}', space=sflag, size = 0x4, scoped, tag = 'scoped memory for tpu_custom_call.1']
    #allocation8 [shape = 'u8[8192]{0}', space=vmem, size = 0x2000, scoped, tag = 'input window, operand 4, single buffered']
    #allocation9 [shape = 'u8[65536]{0}', space=vmem, size = 0x10000, scoped, tag = 'input window, operand 7, single buffered']
    #allocation10 [shape = 's32[1]{0}', space=sflag, size = 0x4, scoped, tag = 'scoped memory for tpu_custom_call.1']
    #allocation11 [shape = 'u8[131072]{0}', space=vmem, size = 0x20000, scoped, tag = 'input window, operand 10']
    #allocation12 [shape = 'u8[131072]{0}', space=vmem, size = 0x20000, scoped, tag = 'output window, operand 0']
    %16 = vsyncpa [#allocation4], 0
    %s17 = scalar_lea.sflag [#allocation4], 1
    %18 = vsyncpa %s17, 0
    %19 = vsyncpa [#allocation7], 0
    %20 = vsyncpa [#allocation10], 0
    %21 = vsyncpa [#allocation5], 0
    %s22 = scalar_lea.sflag [#allocation5], 1
    %23 = vsyncpa %s22, 0
    loop: start=0, step=1, limit=6
    $region2: #{tpu_custom_call.1} parent=1 // loop_pre_header
      _
    $region3: #{tpu_custom_call.1} parent=1 // loop_header
      %s25 = sphi 0, %s29
      %p26 = scmp.ge.s32.totalorder %s25, 6
      %s32 = sphi 0, %s44
      %s33 = sphi 0, %s40
      %s34 = sphi 0, %s32
      %s35 = sphi 0, %s33
      %s36 = sphi 0, %s34
      %s37 = sphi 0, %s35
      %s47 = sphi 0, %s49
      %s50 = sphi 0, %s47
      %s51 = sphi 0, %s50
      %s67 = sphi 0, %s51
      %s71 = sphi 0, %s71
      %s73 = sphi 0, %s71
      %s74 = sphi 0, %s73
      %s88 = sphi 0, %s74
      %s92 = sphi 0, %s92
      %s94 = sphi 0, %s92
      %s95 = sphi 0, %s94
      %s109 = sphi 0, %s95
      %s113 = sphi 0, %s113
      %s115 = sphi 0, %s113
      %s116 = sphi 0, %s115
      %s130 = sphi 0, %s116
      %s134 = sphi 0, %s134
      %s136 = sphi 0, %s134
      %s137 = sphi 0, %s136
      %s151 = sphi 0, %s137
      %s155 = sphi 0, %s155
      %s157 = sphi 0, %s155
      %s158 = sphi 0, %s157
      %s172 = sphi 0, %s158
      %s176 = sphi 0, %s176
      %s178 = sphi 0, %s176
      %s179 = sphi 0, %s178
      %s193 = sphi 0, %s179
      %s197 = sphi 0, %s197
      %s199 = sphi 0, %s197
      %s200 = sphi 0, %s199
      %s214 = sphi 0, %s200
      %s218 = sphi 0, %s218
      %s220 = sphi 0, %s218
      %s221 = sphi 0, %s220
      %s235 = sphi 0, %s221
      %s239 = sphi 0, %s239
      %s241 = sphi 0, %s239
      %s242 = sphi 0, %s241
      %s256 = sphi 0, %s242
      %s264 = sphi 0, %s266
      %s267 = sphi 0, %s264
      %s268 = sphi 0, %s267
      %s284 = sphi 0, %s268
      %s292 = sphi 0, %s294
      %s295 = sphi 0, %s292
      %s296 = sphi 0, %s295
      %s312 = sphi 0, %s296
    $region4: #{tpu_custom_call.1} parent=1 // loop_header_branch
      %28 = sbr.rel (%p26) target = $region8
    $region5: #{tpu_custom_call.1} parent=1 // loop_body
      %s30 = ssub.s32 %s25, 1
      %s31 = ssub.s32 %s25, 2
      %s38 = sadd.s32 1, %s33
      %p39 = scmp.ge.s32.totalorder %s38, 2
      %s40 = scalar_select %p39, 0, %s38
      %s41 = sadd.s32 1, %s32
      %s42 = scalar_select %p39, %s41, %s32
      %p43 = scmp.ge.s32.totalorder %s42, 2
      %s44 = scalar_select %p43, 0, %s42
      %s45 = ssub.s32 %s32, %s44
      %p46 = scmp.eq.s32.totalorder %s45, 0
      %s48 = sadd.s32 %s47, 1
      %s49 = scalar_select %p46, %s47, %s48
      %p52 = pneg %p46
      %p53 = scmp.eq.s32.totalorder %s25, 3
      %p54 = por %p52, %p53
      %p55 = scmp.ne.s32.totalorder %s47, %s50
      %p56 = scmp.eq.s32.totalorder %s25, 0
      %p57 = por %p55, %p56
      %p58 = scmp.ne.s32.totalorder %s47, %s50
      %p59 = scmp.eq.s32.totalorder %s30, 3
      %p60 = por %p58, %p59
      %p61 = scmp.ne.s32.totalorder %s50, %s51
      %p62 = scmp.eq.s32.totalorder %s30, 0
      %p63 = por %p61, %p62
      %p64 = scmp.ne.s32.totalorder %s50, %s51
      %p65 = scmp.eq.s32.totalorder %s31, 3
      %p66 = por %p64, %p65
      %p68 = scmp.ne.s32.totalorder %s51, %s67
      %p69 = scmp.eq.s32.totalorder %s31, 0
      %p70 = por %p68, %p69
      %s72 = sadd.s32 %s71, 1
      %p75 = scmp.eq.s32.totalorder %s25, 3
      %p76 = scmp.ne.s32.totalorder %s71, %s73
      %p77 = scmp.eq.s32.totalorder %s25, 0
      %p78 = por %p76, %p77
      %p79 = scmp.ne.s32.totalorder %s71, %s73
      %p80 = scmp.eq.s32.totalorder %s30, 3
      %p81 = por %p79, %p80
      %p82 = scmp.ne.s32.totalorder %s73, %s74
      %p83 = scmp.eq.s32.totalorder %s30, 0
      %p84 = por %p82, %p83
      %p85 = scmp.ne.s32.totalorder %s73, %s74
      %p86 = scmp.eq.s32.totalorder %s31, 3
      %p87 = por %p85, %p86
      %p89 = scmp.ne.s32.totalorder %s74, %s88
      %p90 = scmp.eq.s32.totalorder %s31, 0
      %p91 = por %p89, %p90
      %s93 = sadd.s32 %s92, 1
      %p96 = scmp.eq.s32.totalorder %s25, 3
      %p97 = scmp.ne.s32.totalorder %s92, %s94
      %p98 = scmp.eq.s32.totalorder %s25, 0
      %p99 = por %p97, %p98
      %p100 = scmp.ne.s32.totalorder %s92, %s94
      %p101 = scmp.eq.s32.totalorder %s30, 3
      %p102 = por %p100, %p101
      %p103 = scmp.ne.s32.totalorder %s94, %s95
      %p104 = scmp.eq.s32.totalorder %s30, 0
      %p105 = por %p103, %p104
      %p106 = scmp.ne.s32.totalorder %s94, %s95
      %p107 = scmp.eq.s32.totalorder %s31, 3
      %p108 = por %p106, %p107
      %p110 = scmp.ne.s32.totalorder %s95, %s109
      %p111 = scmp.eq.s32.totalorder %s31, 0
      %p112 = por %p110, %p111
      %s114 = sadd.s32 %s113, 1
      %p117 = scmp.eq.s32.totalorder %s25, 3
      %p118 = scmp.ne.s32.totalorder %s113, %s115
      %p119 = scmp.eq.s32.totalorder %s25, 0
      %p120 = por %p118, %p119
      %p121 = scmp.ne.s32.totalorder %s113, %s115
      %p122 = scmp.eq.s32.totalorder %s30, 3
      %p123 = por %p121, %p122
      %p124 = scmp.ne.s32.totalorder %s115, %s116
      %p125 = scmp.eq.s32.totalorder %s30, 0
      %p126 = por %p124, %p125
      %p127 = scmp.ne.s32.totalorder %s115, %s116
      %p128 = scmp.eq.s32.totalorder %s31, 3
      %p129 = por %p127, %p128
      %p131 = scmp.ne.s32.totalorder %s116, %s130
      %p132 = scmp.eq.s32.totalorder %s31, 0
      %p133 = por %p131, %p132
      %s135 = sadd.s32 %s134, 1
      %p138 = scmp.eq.s32.totalorder %s25, 3
      %p139 = scmp.ne.s32.totalorder %s134, %s136
      %p140 = scmp.eq.s32.totalorder %s25, 0
      %p141 = por %p139, %p140
      %p142 = scmp.ne.s32.totalorder %s134, %s136
      %p143 = scmp.eq.s32.totalorder %s30, 3
      %p144 = por %p142, %p143
      %p145 = scmp.ne.s32.totalorder %s136, %s137
      %p146 = scmp.eq.s32.totalorder %s30, 0
      %p147 = por %p145, %p146
      %p148 = scmp.ne.s32.totalorder %s136, %s137
      %p149 = scmp.eq.s32.totalorder %s31, 3
      %p150 = por %p148, %p149
      %p152 = scmp.ne.s32.totalorder %s137, %s151
      %p153 = scmp.eq.s32.totalorder %s31, 0
      %p154 = por %p152, %p153
      %s156 = sadd.s32 %s155, 1
      %p159 = scmp.eq.s32.totalorder %s25, 3
      %p160 = scmp.ne.s32.totalorder %s155, %s157
      %p161 = scmp.eq.s32.totalorder %s25, 0
      %p162 = por %p160, %p161
      %p163 = scmp.ne.s32.totalorder %s155, %s157
      %p164 = scmp.eq.s32.totalorder %s30, 3
      %p165 = por %p163, %p164
      %p166 = scmp.ne.s32.totalorder %s157, %s158
      %p167 = scmp.eq.s32.totalorder %s30, 0
      %p168 = por %p166, %p167
      %p169 = scmp.ne.s32.totalorder %s157, %s158
      %p170 = scmp.eq.s32.totalorder %s31, 3
      %p171 = por %p169, %p170
      %p173 = scmp.ne.s32.totalorder %s158, %s172
      %p174 = scmp.eq.s32.totalorder %s31, 0
      %p175 = por %p173, %p174
      %s177 = sadd.s32 %s176, 1
      %p180 = scmp.eq.s32.totalorder %s25, 3
      %p181 = scmp.ne.s32.totalorder %s176, %s178
      %p182 = scmp.eq.s32.totalorder %s25, 0
      %p183 = por %p181, %p182
      %p184 = scmp.ne.s32.totalorder %s176, %s178
      %p185 = scmp.eq.s32.totalorder %s30, 3
      %p186 = por %p184, %p185
      %p187 = scmp.ne.s32.totalorder %s178, %s179
      %p188 = scmp.eq.s32.totalorder %s30, 0
      %p189 = por %p187, %p188
      %p190 = scmp.ne.s32.totalorder %s178, %s179
      %p191 = scmp.eq.s32.totalorder %s31, 3
      %p192 = por %p190, %p191
      %p194 = scmp.ne.s32.totalorder %s179, %s193
      %p195 = scmp.eq.s32.totalorder %s31, 0
      %p196 = por %p194, %p195
      %s198 = sadd.s32 %s197, 1
      %p201 = scmp.eq.s32.totalorder %s25, 3
      %p202 = scmp.ne.s32.totalorder %s197, %s199
      %p203 = scmp.eq.s32.totalorder %s25, 0
      %p204 = por %p202, %p203
      %p205 = scmp.ne.s32.totalorder %s197, %s199
      %p206 = scmp.eq.s32.totalorder %s30, 3
      %p207 = por %p205, %p206
      %p208 = scmp.ne.s32.totalorder %s199, %s200
      %p209 = scmp.eq.s32.totalorder %s30, 0
      %p210 = por %p208, %p209
      %p211 = scmp.ne.s32.totalorder %s199, %s200
      %p212 = scmp.eq.s32.totalorder %s31, 3
      %p213 = por %p211, %p212
      %p215 = scmp.ne.s32.totalorder %s200, %s214
      %p216 = scmp.eq.s32.totalorder %s31, 0
      %p217 = por %p215, %p216
      %s219 = sadd.s32 %s218, 1
      %p222 = scmp.eq.s32.totalorder %s25, 3
      %p223 = scmp.ne.s32.totalorder %s218, %s220
      %p224 = scmp.eq.s32.totalorder %s25, 0
      %p225 = por %p223, %p224
      %p226 = scmp.ne.s32.totalorder %s218, %s220
      %p227 = scmp.eq.s32.totalorder %s30, 3
      %p228 = por %p226, %p227
      %p229 = scmp.ne.s32.totalorder %s220, %s221
      %p230 = scmp.eq.s32.totalorder %s30, 0
      %p231 = por %p229, %p230
      %p232 = scmp.ne.s32.totalorder %s220, %s221
      %p233 = scmp.eq.s32.totalorder %s31, 3
      %p234 = por %p232, %p233
      %p236 = scmp.ne.s32.totalorder %s221, %s235
      %p237 = scmp.eq.s32.totalorder %s31, 0
      %p238 = por %p236, %p237
      %s240 = sadd.s32 %s239, 1
      %p243 = scmp.eq.s32.totalorder %s25, 3
      %p244 = scmp.ne.s32.totalorder %s239, %s241
      %p245 = scmp.eq.s32.totalorder %s25, 0
      %p246 = por %p244, %p245
      %p247 = scmp.ne.s32.totalorder %s239, %s241
      %p248 = scmp.eq.s32.totalorder %s30, 3
      %p249 = por %p247, %p248
      %p250 = scmp.ne.s32.totalorder %s241, %s242
      %p251 = scmp.eq.s32.totalorder %s30, 0
      %p252 = por %p250, %p251
      %p253 = scmp.ne.s32.totalorder %s241, %s242
      %p254 = scmp.eq.s32.totalorder %s31, 3
      %p255 = por %p253, %p254
      %p257 = scmp.ne.s32.totalorder %s242, %s256
      %p258 = scmp.eq.s32.totalorder %s31, 0
      %p259 = por %p257, %p258
      %s260 = ssub.s32 %s32, %s44
      %s261 = ssub.s32 %s33, %s40
      %s262 = sor.u32 %s260, %s261
      %p263 = scmp.eq.s32.totalorder %s262, 0
      %s265 = sadd.s32 %s264, 1
      %s266 = scalar_select %p263, %s264, %s265
      %p269 = pneg %p263
      %p270 = scmp.eq.s32.totalorder %s25, 3
      %p271 = por %p269, %p270
      %p272 = scmp.ne.s32.totalorder %s264, %s267
      %p273 = scmp.eq.s32.totalorder %s25, 0
      %p274 = por %p272, %p273
      %p275 = scmp.ne.s32.totalorder %s264, %s267
      %p276 = scmp.eq.s32.totalorder %s30, 3
      %p277 = por %p275, %p276
      %p278 = scmp.ne.s32.totalorder %s267, %s268
      %p279 = scmp.eq.s32.totalorder %s30, 0
      %p280 = por %p278, %p279
      %p281 = scmp.ne.s32.totalorder %s267, %s268
      %p282 = scmp.eq.s32.totalorder %s31, 3
      %p283 = por %p281, %p282
      %p285 = scmp.ne.s32.totalorder %s268, %s284
      %p286 = scmp.eq.s32.totalorder %s31, 0
      %p287 = por %p285, %p286
      %s288 = ssub.s32 %s32, %s44
      %s289 = ssub.s32 %s33, %s40
      %s290 = sor.u32 %s288, %s289
      %p291 = scmp.eq.s32.totalorder %s290, 0
      %s293 = sadd.s32 %s292, 1
      %s294 = scalar_select %p291, %s292, %s293
      %p297 = pneg %p291
      %p298 = scmp.eq.s32.totalorder %s25, 3
      %p299 = por %p297, %p298
      %p300 = scmp.ne.s32.totalorder %s292, %s295
      %p301 = scmp.eq.s32.totalorder %s25, 0
      %p302 = por %p300, %p301
      %p303 = scmp.ne.s32.totalorder %s292, %s295
      %p304 = scmp.eq.s32.totalorder %s30, 3
      %p305 = por %p303, %p304
      %p306 = scmp.ne.s32.totalorder %s295, %s296
      %p307 = scmp.eq.s32.totalorder %s30, 0
      %p308 = por %p306, %p307
      %p309 = scmp.ne.s32.totalorder %s295, %s296
      %p310 = scmp.eq.s32.totalorder %s31, 3
      %p311 = por %p309, %p310
      %p313 = scmp.ne.s32.totalorder %s296, %s312
      %p314 = scmp.eq.s32.totalorder %s31, 0
      %p315 = por %p313, %p314
      %p316 = scmp.le.s32.totalorder 1, %s25
      %p317 = scmp.lt.s32.totalorder %s25, 5
      %p318 = pnand %p316, %p317
      %p319 = pneg %p318
      // Predicated region
      $region9: #{tpu_custom_call.1} parent=5 // pred_check
        _
      $region10: #{tpu_custom_call.1} parent=5 // pred_check_branch
        %321 = sbr.rel (%p318) target = $region12
      $region11: #{tpu_custom_call.1} parent=5 // pred_region
        %s322 = ssub.s32 %s25, 1
        // Predicated region
        $region13: #{tpu_custom_call.1} parent=11 // pred_check
          %p323 = pneg %p84
        $region14: #{tpu_custom_call.1} parent=11 // pred_check_branch
          %325 = sbr.rel (%p323) target = $region16
        $region15: #{tpu_custom_call.1} parent=11 // pred_region
          %s327 = ssub.s32 2048, 2048
          %328 = vsyncadd [#allocation7], %s327
          %s329 = sshll.u32 [#allocation6], 4
          %s330 = int_to_ptr.vmem [resolvable:$true] %s329
          %335 = dma.hbm_to_vmem [thread:$0]  %s1, 2048, %s330, [#allocation7], 128, 128, 8
        $region16: #{tpu_custom_call.1} parent=11 // pred_fallthru
          _
        // Predicated region
        $region17: #{tpu_custom_call.1} parent=11 // pred_check
          %p336 = pneg %p105
        $region18: #{tpu_custom_call.1} parent=11 // pred_check_branch
          %338 = sbr.rel (%p336) target = $region20
        $region19: #{tpu_custom_call.1} parent=11 // pred_region
          _
        $region20: #{tpu_custom_call.1} parent=11 // pred_fallthru
          _
        // Predicated region
        $region21: #{tpu_custom_call.1} parent=11 // pred_check
          %p339 = pneg %p126
        $region22: #{tpu_custom_call.1} parent=11 // pred_check_branch
          %341 = sbr.rel (%p339) target = $region24
        $region23: #{tpu_custom_call.1} parent=11 // pred_region
          _
        $region24: #{tpu_custom_call.1} parent=11 // pred_fallthru
          _
        // Predicated region
        $region25: #{tpu_custom_call.1} parent=11 // pred_check
          %p342 = pneg %p147
        $region26: #{tpu_custom_call.1} parent=11 // pred_check_branch
          %344 = sbr.rel (%p342) target = $region28
        $region27: #{tpu_custom_call.1} parent=11 // pred_region
          %s346 = ssub.s32 256, 256
          %347 = vsyncadd [#allocation7], %s346
          %s348 = sshll.u32 [#allocation8], 4
          %s349 = int_to_ptr.vmem [resolvable:$true] %s348
          %354 = dma.hbm_to_vmem [thread:$0]  %s4, 256, %s349, [#allocation7], 128, 128, 8
        $region28: #{tpu_custom_call.1} parent=11 // pred_fallthru
          _
        // Predicated region
        $region29: #{tpu_custom_call.1} parent=11 // pred_check
          %p355 = pneg %p168
        $region30: #{tpu_custom_call.1} parent=11 // pred_check_branch
          %357 = sbr.rel (%p355) target = $region32
        $region31: #{tpu_custom_call.1} parent=11 // pred_region
          _
        $region32: #{tpu_custom_call.1} parent=11 // pred_fallthru
          _
        // Predicated region
        $region33: #{tpu_custom_call.1} parent=11 // pred_check
          %p358 = pneg %p189
        $region34: #{tpu_custom_call.1} parent=11 // pred_check_branch
          %360 = sbr.rel (%p358) target = $region36
        $region35: #{tpu_custom_call.1} parent=11 // pred_region
          _
        $region36: #{tpu_custom_call.1} parent=11 // pred_fallthru
          _
        // Predicated region
        $region37: #{tpu_custom_call.1} parent=11 // pred_check
          %p361 = pneg %p210
        $region38: #{tpu_custom_call.1} parent=11 // pred_check_branch
          %363 = sbr.rel (%p361) target = $region40
        $region39: #{tpu_custom_call.1} parent=11 // pred_region
          %s365 = ssub.s32 2048, 2048
          %366 = vsyncadd [#allocation10], %s365
          %s367 = sshll.u32 [#allocation9], 4
          %s368 = int_to_ptr.vmem [resolvable:$true] %s367
          %373 = dma.hbm_to_vmem [thread:$0]  %s7, 2048, %s368, [#allocation10], 128, 128, 8
        $region40: #{tpu_custom_call.1} parent=11 // pred_fallthru
          _
        // Predicated region
        $region41: #{tpu_custom_call.1} parent=11 // pred_check
          %p374 = pneg %p231
        $region42: #{tpu_custom_call.1} parent=11 // pred_check_branch
          %376 = sbr.rel (%p374) target = $region44
        $region43: #{tpu_custom_call.1} parent=11 // pred_region
          _
        $region44: #{tpu_custom_call.1} parent=11 // pred_fallthru
          _
        // Predicated region
        $region45: #{tpu_custom_call.1} parent=11 // pred_check
          %p377 = pneg %p252
        $region46: #{tpu_custom_call.1} parent=11 // pred_check_branch
          %379 = sbr.rel (%p377) target = $region48
        $region47: #{tpu_custom_call.1} parent=11 // pred_region
          _
        $region48: #{tpu_custom_call.1} parent=11 // pred_fallthru
          _
      $region12: #{tpu_custom_call.1} parent=5 // pred_fallthru
        _
      %p380 = scmp.lt.s32.totalorder %s25, 4
      // Predicated region
      $region49: #{tpu_custom_call.1} parent=5 // pred_check
        %p381 = pneg %p380
      $region50: #{tpu_custom_call.1} parent=5 // pred_check_branch
        %383 = sbr.rel (%p381) target = $region52
      $region51: #{tpu_custom_call.1} parent=5 // pred_region
        // Predicated region
        $region53: #{tpu_custom_call.1} parent=51 // pred_check
          %p384 = pneg %p57
        $region54: #{tpu_custom_call.1} parent=51 // pred_check_branch
          %386 = sbr.rel (%p384) target = $region56
        $region55: #{tpu_custom_call.1} parent=51 // pred_region
          %s387 = sand.u32 %s25, 1
          %s388 = scalar_lea.sflag [#allocation4], %s387
          %s389 = sand.u32 %s47, 1
          %s390 = smul.addr %s389, 432
          %s391 = scalar_lea.vmem [#allocation3], %s390
          %s393 = ssub.s32 6912, 6912
          %394 = vsyncadd %s388, %s393
          %s395 = smul.addr %s32, 54
          %s396 = smul.addr %s395, 128
          %s397 = scalar_lea.hbm %s0, %s396
          %s398 = sshll.u32 %s391, 4
          %s399 = int_to_ptr.vmem [resolvable:$true] %s398
          %404 = dma.hbm_to_vmem [thread:$0]  %s397, 6912, %s399, %s388, 128, 128, 8
        $region56: #{tpu_custom_call.1} parent=51 // pred_fallthru
          _
        // Predicated region
        $region57: #{tpu_custom_call.1} parent=51 // pred_check
          %p405 = pneg %p274
        $region58: #{tpu_custom_call.1} parent=51 // pred_check_branch
          %407 = sbr.rel (%p405) target = $region60
        $region59: #{tpu_custom_call.1} parent=51 // pred_region
          %s408 = sand.u32 %s25, 1
          %s409 = scalar_lea.sflag [#allocation4], %s408
          %s410 = sand.u32 %s264, 1
          %s411 = smul.addr %s410, 128
          %s412 = scalar_lea.vmem [#allocation11], %s411
          %s413 = smul.u32 16, %s33
          %s415 = ssub.s32 2048, 2048
          %416 = vsyncadd %s409, %s415
          %s417 = smul.addr %s32, 32
          %s418 = sadd.s32 %s413, %s417
          %s419 = smul.addr %s418, 128
          %s420 = scalar_lea.hbm %s10, %s419
          %s421 = sshll.u32 %s412, 4
          %s422 = int_to_ptr.vmem [resolvable:$true] %s421
          %427 = dma.hbm_to_vmem [thread:$0]  %s420, 2048, %s422, %s409, 128, 128, 8
        $region60: #{tpu_custom_call.1} parent=51 // pred_fallthru
          _
      $region52: #{tpu_custom_call.1} parent=5 // pred_fallthru
        _
      %p428 = scmp.le.s32.totalorder 1, %s25
      %p429 = scmp.lt.s32.totalorder %s25, 5
      %p430 = pnand %p428, %p429
      %p431 = pneg %p430
      // Predicated region
      $region61: #{tpu_custom_call.1} parent=5 // pred_check
        _
      $region62: #{tpu_custom_call.1} parent=5 // pred_check_branch
        %433 = sbr.rel (%p430) target = $region64
      $region63: #{tpu_custom_call.1} parent=5 // pred_region
        %s434 = ssub.s32 %s25, 1
        %s435 = sand.u32 %s30, 1
        %s436 = scalar_lea.sflag [#allocation4], %s435
        %s437 = sand.u32 %s50, 1
        %s438 = smul.addr %s437, 432
        %s439 = scalar_lea.vmem [#allocation3], %s438
        // Predicated region
        $region65: #{tpu_custom_call.1} parent=63 // pred_check
          %p440 = pneg %p63
        $region66: #{tpu_custom_call.1} parent=63 // pred_check_branch
          %442 = sbr.rel (%p440) target = $region68
        $region67: #{tpu_custom_call.1} parent=63 // pred_region
          %443 = dma.done %s436, 6912
        $region68: #{tpu_custom_call.1} parent=63 // pred_fallthru
          _
        // Predicated region
        $region69: #{tpu_custom_call.1} parent=63 // pred_check
          %p444 = pneg %p84
        $region70: #{tpu_custom_call.1} parent=63 // pred_check_branch
          %446 = sbr.rel (%p444) target = $region72
        $region71: #{tpu_custom_call.1} parent=63 // pred_region
          %447 = dma.done [#allocation7], 2048
        $region72: #{tpu_custom_call.1} parent=63 // pred_fallthru
          _
        // Predicated region
        $region73: #{tpu_custom_call.1} parent=63 // pred_check
          %p448 = pneg %p147
        $region74: #{tpu_custom_call.1} parent=63 // pred_check_branch
          %450 = sbr.rel (%p448) target = $region76
        $region75: #{tpu_custom_call.1} parent=63 // pred_region
          %451 = dma.done [#allocation7], 256
        $region76: #{tpu_custom_call.1} parent=63 // pred_fallthru
          _
        // Predicated region
        $region77: #{tpu_custom_call.1} parent=63 // pred_check
          %p452 = pneg %p210
        $region78: #{tpu_custom_call.1} parent=63 // pred_check_branch
          %454 = sbr.rel (%p452) target = $region80
        $region79: #{tpu_custom_call.1} parent=63 // pred_region
          %455 = dma.done [#allocation10], 2048
        $region80: #{tpu_custom_call.1} parent=63 // pred_fallthru
          _
        %s456 = sand.u32 %s30, 1
        %s457 = scalar_lea.sflag [#allocation4], %s456
        %s458 = sand.u32 %s267, 1
        %s459 = smul.addr %s458, 128
        %s460 = scalar_lea.vmem [#allocation11], %s459
        // Predicated region
        $region81: #{tpu_custom_call.1} parent=63 // pred_check
          %p461 = pneg %p280
        $region82: #{tpu_custom_call.1} parent=63 // pred_check_branch
          %463 = sbr.rel (%p461) target = $region84
        $region83: #{tpu_custom_call.1} parent=63 // pred_region
          %464 = dma.done %s457, 2048
        $region84: #{tpu_custom_call.1} parent=63 // pred_fallthru
          _
        %s465 = sand.u32 %s30, 1
        %s466 = scalar_lea.sflag [#allocation4], %s465
        %s467 = sand.u32 %s50, 1
        %s468 = smul.addr %s467, 432
        %s469 = scalar_lea.vmem [#allocation3], %s468
        %p470 = pneg %p63
        %p471 = pneg %p60
        %p472 = pneg %p84
        %p473 = pneg %p81
        %p474 = pneg %p105
        %p475 = pneg %p102
        %p476 = pneg %p126
        %p477 = pneg %p123
        %p478 = pneg %p147
        %p479 = pneg %p144
        %p480 = pneg %p168
        %p481 = pneg %p165
        %p482 = pneg %p189
        %p483 = pneg %p186
        %p484 = pneg %p210
        %p485 = pneg %p207
        %p486 = pneg %p231
        %p487 = pneg %p228
        %p488 = pneg %p252
        %p489 = pneg %p249
        %s490 = sand.u32 %s30, 1
        %s491 = scalar_lea.sflag [#allocation4], %s490
        %s492 = sand.u32 %s267, 1
        %s493 = smul.addr %s492, 128
        %s494 = scalar_lea.vmem [#allocation11], %s493
        %p495 = pneg %p280
        %p496 = pneg %p277
        %p497 = pneg %p308
        %p498 = pneg %p305
        %s499 = sand.u32 %s295, 1
        %s500 = scalar_lea.sflag [#allocation5], %s499
        %s501 = sand.u32 %s295, 1
        %s502 = smul.addr %s501, 128
        %s503 = scalar_lea.vmem [#allocation12], %s502
        %s504 = smul.u32 16, %s35
        %s505 = smul.u32 16, %s35
        %s506 = smul.u32 %s35, 8
        %s507 = smul.u32 %s506, 24
        %s508 = scalar_lea.vmem %s439, %s507 [#allocation3]
        %v509 = vld [vmem:[%s508] sm:$0xff]
        %v510 = vld [vmem:[%s508 + $0x8] sm:$0xff]
        %v511 = vld [vmem:[%s508 + $0x10] sm:$0xff]
        %v512 = vld [vmem:[%s508 + $0x18] sm:$0xff]
        %v513 = vld [vmem:[%s508 + $0x20] sm:$0xff]
        %v514 = vld [vmem:[%s508 + $0x28] sm:$0xff]
        %v515 = vld [vmem:[%s508 + $0x30] sm:$0xff]
        %v516 = vld [vmem:[%s508 + $0x38] sm:$0xff]
        %v517 = vld [vmem:[%s508 + $0x40] sm:$0xff]
        %v518 = vld [vmem:[%s508 + $0x48] sm:$0xff]
        %v519 = vld [vmem:[%s508 + $0x50] sm:$0xff]
        %v520 = vld [vmem:[%s508 + $0x58] sm:$0xff]
        %v521 = vld [vmem:[%s508 + $0x60] sm:$0xff]
        %v522 = vld [vmem:[%s508 + $0x68] sm:$0xff]
        %v523 = vld [vmem:[%s508 + $0x70] sm:$0xff]
        %v524 = vld [vmem:[%s508 + $0x78] sm:$0xff]
        %v525 = vld [vmem:[%s508 + $0x80] sm:$0xff]
        %v526 = vld [vmem:[%s508 + $0x88] sm:$0xff]
        %v527 = vld [vmem:[%s508 + $0x90] sm:$0xff]
        %v528 = vld [vmem:[%s508 + $0x98] sm:$0xff]
        %v529 = vld [vmem:[%s508 + $0xa0] sm:$0xff]
        %v530 = vld [vmem:[%s508 + $0xa8] sm:$0xff]
        %v531 = vld [vmem:[%s508 + $0xb0] sm:$0xff]
        %v532 = vld [vmem:[%s508 + $0xb8] sm:$0xff]
        %v533 = vld [vmem:[%s508 + $0xc0] sm:$0xff]
        %v534 = vld [vmem:[%s508 + $0xc8] sm:$0xff]
        %v535 = vld [vmem:[%s508 + $0xd0] sm:$0xff]
        %v536 = vld [vmem:[%s508 + $0xd8] sm:$0xff]
        %v537 = vld [vmem:[%s508 + $0xe0] sm:$0xff]
        %v538 = vld [vmem:[%s508 + $0xe8] sm:$0xff]
        %v539 = vld [vmem:[#allocation6] sm:$0xff]
        %v540 = vld [vmem:[#allocation6 + $0x8] sm:$0xff]
        %v541 = vld [vmem:[#allocation6 + $0x10] sm:$0xff]
        %v542 = vld [vmem:[#allocation6 + $0x18] sm:$0xff]
        %v543 = vld [vmem:[#allocation6 + $0x20] sm:$0xff]
        %v544 = vld [vmem:[#allocation6 + $0x28] sm:$0xff]
        %v545 = vld [vmem:[#allocation6 + $0x30] sm:$0xff]
        %v546 = vld [vmem:[#allocation6 + $0x38] sm:$0xff]
        %v547 = vld [vmem:[#allocation6 + $0x40] sm:$0xff]
        %v548 = vld [vmem:[#allocation6 + $0x48] sm:$0xff]
        %v549 = vld [vmem:[#allocation6 + $0x50] sm:$0xff]
        %v550 = vld [vmem:[#allocation6 + $0x58] sm:$0xff]
        %v551 = vld [vmem:[#allocation6 + $0x60] sm:$0xff]
        %v552 = vld [vmem:[#allocation6 + $0x68] sm:$0xff]
        %v553 = vld [vmem:[#allocation6 + $0x70] sm:$0xff]
        %v554 = vld [vmem:[#allocation6 + $0x78] sm:$0xff]
        %555 = vmatprep.subr.mxu0 0.0
        %556 = vmatpush1.msra.mxu0 %v554
        %557 = vmatprep.subr.mxu0 0.0
        %558 = vmatpush1.msra.mxu0 %v553
        %559 = vmatprep.subr.mxu0 0.0
        %560 = vmatpush1.msra.mxu0 %v552
        %561 = vmatprep.subr.mxu0 0.0
        %562 = vmatpush1.msra.mxu0 %v551
        %563 = vmatprep.subr.mxu0 0.0
        %564 = vmatpush1.msra.mxu0 %v550
        %565 = vmatprep.subr.mxu0 0.0
        %566 = vmatpush1.msra.mxu0 %v549
        %567 = vmatprep.subr.mxu0 0.0
        %568 = vmatpush1.msra.mxu0 %v548
        %569 = vmatprep.subr.mxu0 0.0
        %570 = vmatpush1.msra.mxu0 %v547
        %571 = vmatprep.subr.mxu0 0.0
        %572 = vmatpush1.msra.mxu0 %v546
        %573 = vmatprep.subr.mxu0 0.0
        %574 = vmatpush1.msra.mxu0 %v545
        %575 = vmatprep.subr.mxu0 0.0
        %576 = vmatpush1.msra.mxu0 %v544
        %577 = vmatprep.subr.mxu0 0.0
        %578 = vmatpush1.msra.mxu0 %v543
        %579 = vmatprep.subr.mxu0 0.0
        %580 = vmatpush1.msra.mxu0 %v542
        %581 = vmatprep.subr.mxu0 0.0
        %582 = vmatpush1.msra.mxu0 %v541
        %583 = vmatprep.subr.mxu0 0.0
        %584 = vmatpush1.msra.mxu0 %v540
        %585 = vmatprep.subr.mxu0 0.0
        %586 = vmatpush1.msra.mxu0 %v539
        %587 = vmatprep.subr.mxu0 0.0
        %588 = vmatpush2.msra.mxu0 0.0
        %589 = vmatprep.subr.mxu0 0.0
        %590 = vmatpush2.msra.mxu0 0.0
        %591 = vmatprep.subr.mxu0 0.0
        %592 = vmatpush2.msra.mxu0 0.0
        %593 = vmatprep.subr.mxu0 0.0
        %594 = vmatpush2.msra.mxu0 0.0
        %595 = vmatprep.subr.mxu0 0.0
        %596 = vmatpush2.msra.mxu0 0.0
        %597 = vmatprep.subr.mxu0 0.0
        %598 = vmatpush2.msra.mxu0 0.0
        %599 = vmatprep.subr.mxu0 0.0
        %600 = vmatpush2.msra.mxu0 0.0
        %601 = vmatprep.subr.mxu0 0.0
        %602 = vmatpush2.msra.mxu0 0.0
        %603 = vmatprep.subr.mxu0 0.0
        %604 = vmatpush2.msra.mxu0 0.0
        %605 = vmatprep.subr.mxu0 0.0
        %606 = vmatpush2.msra.mxu0 0.0
        %607 = vmatprep.subr.mxu0 0.0
        %608 = vmatpush2.msra.mxu0 0.0
        %609 = vmatprep.subr.mxu0 0.0
        %610 = vmatpush2.msra.mxu0 0.0
        %611 = vmatprep.subr.mxu0 0.0
        %612 = vmatpush2.msra.mxu0 0.0
        %613 = vmatprep.subr.mxu0 0.0
        %614 = vmatpush2.msra.mxu0 0.0
        %615 = vmatprep.subr.mxu0 0.0
        %616 = vmatpush2.msra.mxu0 0.0
        %617 = vmatprep.subr.mxu0 0.0
        %618 = vmatpush2.msra.mxu0 0.0
        %619 = vmatprep.mubr.f32.mxu0 0.0
        %620 = vmatmul.mubr.f32.gmra.mxu0 %v509
        %v621 = vpop.f32.mrf.mxu0
        %v622 = vadd.f32 0.0, %v621
        %v623 = vpop.f32.mrf.mxu0
        %624 = vmatprep.mubr.f32.mxu0 0.0
        %625 = vmatmul.mubr.f32.gmra.mxu0 %v510
        %v626 = vpop.f32.mrf.mxu0
        %v627 = vadd.f32 0.0, %v626
        %v628 = vpop.f32.mrf.mxu0
        %629 = vmatprep.mubr.f32.mxu0 0.0
        %630 = vmatmul.mubr.f32.gmra.mxu0 %v511
        %v631 = vpop.f32.mrf.mxu0
        %v632 = vadd.f32 0.0, %v631
        %v633 = vpop.f32.mrf.mxu0
        %634 = vmatprep.mubr.f32.mxu0 0.0
        %635 = vmatmul.mubr.f32.gmra.mxu0 %v512
        %v636 = vpop.f32.mrf.mxu0
        %v637 = vadd.f32 0.0, %v636
        %v638 = vpop.f32.mrf.mxu0
        %639 = vmatprep.mubr.f32.mxu0 0.0
        %640 = vmatmul.mubr.f32.gmra.mxu0 %v513
        %v641 = vpop.f32.mrf.mxu0
        %v642 = vadd.f32 0.0, %v641
        %v643 = vpop.f32.mrf.mxu0
        %644 = vmatprep.mubr.f32.mxu0 0.0
        %645 = vmatmul.mubr.f32.gmra.mxu0 %v514
        %v646 = vpop.f32.mrf.mxu0
        %v647 = vadd.f32 0.0, %v646
        %v648 = vpop.f32.mrf.mxu0
        %649 = vmatprep.mubr.f32.mxu0 0.0
        %650 = vmatmul.mubr.f32.gmra.mxu0 %v515
        %v651 = vpop.f32.mrf.mxu0
        %v652 = vadd.f32 0.0, %v651
        %v653 = vpop.f32.mrf.mxu0
        %654 = vmatprep.mubr.f32.mxu0 0.0
        %655 = vmatmul.mubr.f32.gmra.mxu0 %v516
        %v656 = vpop.f32.mrf.mxu0
        %v657 = vadd.f32 0.0, %v656
        %v658 = vpop.f32.mrf.mxu0
        %659 = vmatprep.mubr.f32.mxu0 0.0
        %660 = vmatmul.mubr.f32.gmra.mxu0 %v517
        %v661 = vpop.f32.mrf.mxu0
        %v662 = vadd.f32 0.0, %v661
        %v663 = vpop.f32.mrf.mxu0
        %664 = vmatprep.mubr.f32.mxu0 0.0
        %665 = vmatmul.mubr.f32.gmra.mxu0 %v518
        %v666 = vpop.f32.mrf.mxu0
        %v667 = vadd.f32 0.0, %v666
        %v668 = vpop.f32.mrf.mxu0
        %669 = vmatprep.mubr.f32.mxu0 0.0
        %670 = vmatmul.mubr.f32.gmra.mxu0 %v519
        %v671 = vpop.f32.mrf.mxu0
        %v672 = vadd.f32 0.0, %v671
        %v673 = vpop.f32.mrf.mxu0
        %674 = vmatprep.mubr.f32.mxu0 0.0
        %675 = vmatmul.mubr.f32.gmra.mxu0 %v520
        %v676 = vpop.f32.mrf.mxu0
        %v677 = vadd.f32 0.0, %v676
        %v678 = vpop.f32.mrf.mxu0
        %679 = vmatprep.mubr.f32.mxu0 0.0
        %680 = vmatmul.mubr.f32.gmra.mxu0 %v521
        %v681 = vpop.f32.mrf.mxu0
        %v682 = vadd.f32 0.0, %v681
        %v683 = vpop.f32.mrf.mxu0
        %684 = vmatprep.mubr.f32.mxu0 0.0
        %685 = vmatmul.mubr.f32.gmra.mxu0 %v522
        %v686 = vpop.f32.mrf.mxu0
        %v687 = vadd.f32 0.0, %v686
        %v688 = vpop.f32.mrf.mxu0
        %689 = vmatprep.mubr.f32.mxu0 0.0
        %690 = vmatmul.mubr.f32.gmra.mxu0 %v523
        %v691 = vpop.f32.mrf.mxu0
        %v692 = vadd.f32 0.0, %v691
        %v693 = vpop.f32.mrf.mxu0
        %694 = vmatprep.mubr.f32.mxu0 0.0
        %695 = vmatmul.mubr.f32.gmra.mxu0 %v524
        %v696 = vpop.f32.mrf.mxu0
        %v697 = vadd.f32 0.0, %v696
        %v698 = vpop.f32.mrf.mxu0
        %699 = vmatprep.mubr.f32.mxu0 0.0
        %700 = vmatmul.mubr.f32.gmra.mxu0 %v525
        %v701 = vpop.f32.mrf.mxu0
        %v702 = vadd.f32 0.0, %v701
        %v703 = vpop.f32.mrf.mxu0
        %704 = vmatprep.mubr.f32.mxu0 0.0
        %705 = vmatmul.mubr.f32.gmra.mxu0 %v526
        %v706 = vpop.f32.mrf.mxu0
        %v707 = vadd.f32 0.0, %v706
        %v708 = vpop.f32.mrf.mxu0
        %709 = vmatprep.mubr.f32.mxu0 0.0
        %710 = vmatmul.mubr.f32.gmra.mxu0 %v527
        %v711 = vpop.f32.mrf.mxu0
        %v712 = vadd.f32 0.0, %v711
        %v713 = vpop.f32.mrf.mxu0
        %714 = vmatprep.mubr.f32.mxu0 0.0
        %715 = vmatmul.mubr.f32.gmra.mxu0 %v528
        %v716 = vpop.f32.mrf.mxu0
        %v717 = vadd.f32 0.0, %v716
        %v718 = vpop.f32.mrf.mxu0
        %719 = vmatprep.mubr.f32.mxu0 0.0
        %720 = vmatmul.mubr.f32.gmra.mxu0 %v529
        %v721 = vpop.f32.mrf.mxu0
        %v722 = vadd.f32 0.0, %v721
        %v723 = vpop.f32.mrf.mxu0
        %724 = vmatprep.mubr.f32.mxu0 0.0
        %725 = vmatmul.mubr.f32.gmra.mxu0 %v530
        %v726 = vpop.f32.mrf.mxu0
        %v727 = vadd.f32 0.0, %v726
        %v728 = vpop.f32.mrf.mxu0
        %729 = vmatprep.mubr.f32.mxu0 0.0
        %730 = vmatmul.mubr.f32.gmra.mxu0 %v531
        %v731 = vpop.f32.mrf.mxu0
        %v732 = vadd.f32 0.0, %v731
        %v733 = vpop.f32.mrf.mxu0
        %734 = vmatprep.mubr.f32.mxu0 0.0
        %735 = vmatmul.mubr.f32.gmra.mxu0 %v532
        %v736 = vpop.f32.mrf.mxu0
        %v737 = vadd.f32 0.0, %v736
        %v738 = vpop.f32.mrf.mxu0
        %739 = vmatprep.mubr.f32.mxu0 0.0
        %740 = vmatmul.mubr.f32.gmra.mxu0 %v533
        %v741 = vpop.f32.mrf.mxu0
        %v742 = vadd.f32 0.0, %v741
        %v743 = vpop.f32.mrf.mxu0
        %744 = vmatprep.mubr.f32.mxu0 0.0
        %745 = vmatmul.mubr.f32.gmra.mxu0 %v534
        %v746 = vpop.f32.mrf.mxu0
        %v747 = vadd.f32 0.0, %v746
        %v748 = vpop.f32.mrf.mxu0
        %749 = vmatprep.mubr.f32.mxu0 0.0
        %750 = vmatmul.mubr.f32.gmra.mxu0 %v535
        %v751 = vpop.f32.mrf.mxu0
        %v752 = vadd.f32 0.0, %v751
        %v753 = vpop.f32.mrf.mxu0
        %754 = vmatprep.mubr.f32.mxu0 0.0
        %755 = vmatmul.mubr.f32.gmra.mxu0 %v536
        %v756 = vpop.f32.mrf.mxu0
        %v757 = vadd.f32 0.0, %v756
        %v758 = vpop.f32.mrf.mxu0
        %759 = vmatprep.mubr.f32.mxu0 0.0
        %760 = vmatmul.mubr.f32.gmra.mxu0 %v537
        %v761 = vpop.f32.mrf.mxu0
        %v762 = vadd.f32 0.0, %v761
        %v763 = vpop.f32.mrf.mxu0
        %764 = vmatprep.mubr.f32.mxu0 0.0
        %765 = vmatmul.mubr.f32.gmra.mxu0 %v538
        %v766 = vpop.f32.mrf.mxu0
        %v767 = vadd.f32 0.0, %v766
        %v768 = vpop.f32.mrf.mxu0
        %769 = vdwg.mxu0
        %v770 = vld [vmem:[%s2] sm:$0x1]
        %v772 = vlaneseq
        %v773 = vshrl.u32 %v772, 7
        %v774 = vsub.s32 0, %v773
        %v775 = vrot.slane %v770, %v774
        %v777 = vmul.f32 %v622, %v775
        %v778 = vmul.f32 %v627, %v775
        %v779 = vmul.f32 %v632, %v775
        %v780 = vmul.f32 %v637, %v775
        %v781 = vmul.f32 %v642, %v775
        %v782 = vmul.f32 %v647, %v775
        %v783 = vmul.f32 %v652, %v775
        %v784 = vmul.f32 %v657, %v775
        %v785 = vmul.f32 %v662, %v775
        %v786 = vmul.f32 %v667, %v775
        %v787 = vmul.f32 %v672, %v775
        %v788 = vmul.f32 %v677, %v775
        %v789 = vmul.f32 %v682, %v775
        %v790 = vmul.f32 %v687, %v775
        %v791 = vmul.f32 %v692, %v775
        %v792 = vmul.f32 %v697, %v775
        %v793 = vmul.f32 %v702, %v775
        %v794 = vmul.f32 %v707, %v775
        %v795 = vmul.f32 %v712, %v775
        %v796 = vmul.f32 %v717, %v775
        %v797 = vmul.f32 %v722, %v775
        %v798 = vmul.f32 %v727, %v775
        %v799 = vmul.f32 %v732, %v775
        %v800 = vmul.f32 %v737, %v775
        %v801 = vmul.f32 %v742, %v775
        %v802 = vmul.f32 %v747, %v775
        %v803 = vmul.f32 %v752, %v775
        %v804 = vmul.f32 %v757, %v775
        %v805 = vmul.f32 %v762, %v775
        %v806 = vmul.f32 %v767, %v775
        %v807 = vld [vmem:[%s3] sm:$0x1]
        %v809 = vlaneseq
        %v810 = vshrl.u32 %v809, 7
        %v811 = vsub.s32 0, %v810
        %v812 = vrot.slane %v807, %v811
        %v814 = vadd.f32 %v777, %v812
        %v815 = vadd.f32 %v778, %v812
        %v816 = vadd.f32 %v779, %v812
        %v817 = vadd.f32 %v780, %v812
        %v818 = vadd.f32 %v781, %v812
        %v819 = vadd.f32 %v782, %v812
        %v820 = vadd.f32 %v783, %v812
        %v821 = vadd.f32 %v784, %v812
        %v822 = vadd.f32 %v785, %v812
        %v823 = vadd.f32 %v786, %v812
        %v824 = vadd.f32 %v787, %v812
        %v825 = vadd.f32 %v788, %v812
        %v826 = vadd.f32 %v789, %v812
        %v827 = vadd.f32 %v790, %v812
        %v828 = vadd.f32 %v791, %v812
        %v829 = vadd.f32 %v792, %v812
        %v830 = vadd.f32 %v793, %v812
        %v831 = vadd.f32 %v794, %v812
        %v832 = vadd.f32 %v795, %v812
        %v833 = vadd.f32 %v796, %v812
        %v834 = vadd.f32 %v797, %v812
        %v835 = vadd.f32 %v798, %v812
        %v836 = vadd.f32 %v799, %v812
        %v837 = vadd.f32 %v800, %v812
        %v838 = vadd.f32 %v801, %v812
        %v839 = vadd.f32 %v802, %v812
        %v840 = vadd.f32 %v803, %v812
        %v841 = vadd.f32 %v804, %v812
        %v842 = vadd.f32 %v805, %v812
        %v843 = vadd.f32 %v806, %v812
        %v844 = vmax.f32 %v814, 0.0
        %v845 = vmax.f32 %v815, 0.0
        %v846 = vmax.f32 %v816, 0.0
        %v847 = vmax.f32 %v817, 0.0
        %v848 = vmax.f32 %v818, 0.0
        %v849 = vmax.f32 %v819, 0.0
        %v850 = vmax.f32 %v820, 0.0
        %v851 = vmax.f32 %v821, 0.0
        %v852 = vmax.f32 %v822, 0.0
        %v853 = vmax.f32 %v823, 0.0
        %v854 = vmax.f32 %v824, 0.0
        %v855 = vmax.f32 %v825, 0.0
        %v856 = vmax.f32 %v826, 0.0
        %v857 = vmax.f32 %v827, 0.0
        %v858 = vmax.f32 %v828, 0.0
        %v859 = vmax.f32 %v829, 0.0
        %v860 = vmax.f32 %v830, 0.0
        %v861 = vmax.f32 %v831, 0.0
        %v862 = vmax.f32 %v832, 0.0
        %v863 = vmax.f32 %v833, 0.0
        %v864 = vmax.f32 %v834, 0.0
        %v865 = vmax.f32 %v835, 0.0
        %v866 = vmax.f32 %v836, 0.0
        %v867 = vmax.f32 %v837, 0.0
        %v868 = vmax.f32 %v838, 0.0
        %v869 = vmax.f32 %v839, 0.0
        %v870 = vmax.f32 %v840, 0.0
        %v871 = vmax.f32 %v841, 0.0
        %v872 = vmax.f32 %v842, 0.0
        %v873 = vmax.f32 %v843, 0.0
        %v874 = vmin.f32 %v844, 6.0
        %v875 = vmin.f32 %v845, 6.0
        %v876 = vmin.f32 %v846, 6.0
        %v877 = vmin.f32 %v847, 6.0
        %v878 = vmin.f32 %v848, 6.0
        %v879 = vmin.f32 %v849, 6.0
        %v880 = vmin.f32 %v850, 6.0
        %v881 = vmin.f32 %v851, 6.0
        %v882 = vmin.f32 %v852, 6.0
        %v883 = vmin.f32 %v853, 6.0
        %v884 = vmin.f32 %v854, 6.0
        %v885 = vmin.f32 %v855, 6.0
        %v886 = vmin.f32 %v856, 6.0
        %v887 = vmin.f32 %v857, 6.0
        %v888 = vmin.f32 %v858, 6.0
        %v889 = vmin.f32 %v859, 6.0
        %v890 = vmin.f32 %v860, 6.0
        %v891 = vmin.f32 %v861, 6.0
        %v892 = vmin.f32 %v862, 6.0
        %v893 = vmin.f32 %v863, 6.0
        %v894 = vmin.f32 %v864, 6.0
        %v895 = vmin.f32 %v865, 6.0
        %v896 = vmin.f32 %v866, 6.0
        %v897 = vmin.f32 %v867, 6.0
        %v898 = vmin.f32 %v868, 6.0
        %v899 = vmin.f32 %v869, 6.0
        %v900 = vmin.f32 %v870, 6.0
        %v901 = vmin.f32 %v871, 6.0
        %v902 = vmin.f32 %v872, 6.0
        %v903 = vmin.f32 %v873, 6.0
        %904 = vst [vmem:[#allocation2] sm:$0xff] %v874
        %905 = vst [vmem:[#allocation2 + $0x8] sm:$0xff] %v875
        %906 = vst [vmem:[#allocation2 + $0x10] sm:$0xff] %v876
        %907 = vst [vmem:[#allocation2 + $0x18] sm:$0xff] %v877
        %908 = vst [vmem:[#allocation2 + $0x20] sm:$0xff] %v878
        %909 = vst [vmem:[#allocation2 + $0x28] sm:$0xff] %v879
        %910 = vst [vmem:[#allocation2 + $0x30] sm:$0xff] %v880
        %911 = vst [vmem:[#allocation2 + $0x38] sm:$0xff] %v881
        %912 = vst [vmem:[#allocation2 + $0x40] sm:$0xff] %v882
        %913 = vst [vmem:[#allocation2 + $0x48] sm:$0xff] %v883
        %914 = vst [vmem:[#allocation2 + $0x50] sm:$0xff] %v884
        %915 = vst [vmem:[#allocation2 + $0x58] sm:$0xff] %v885
        %916 = vst [vmem:[#allocation2 + $0x60] sm:$0xff] %v886
        %917 = vst [vmem:[#allocation2 + $0x68] sm:$0xff] %v887
        %918 = vst [vmem:[#allocation2 + $0x70] sm:$0xff] %v888
        %919 = vst [vmem:[#allocation2 + $0x78] sm:$0xff] %v889
        %920 = vst [vmem:[#allocation2 + $0x80] sm:$0xff] %v890
        %921 = vst [vmem:[#allocation2 + $0x88] sm:$0xff] %v891
        %922 = vst [vmem:[#allocation2 + $0x90] sm:$0xff] %v892
        %923 = vst [vmem:[#allocation2 + $0x98] sm:$0xff] %v893
        %924 = vst [vmem:[#allocation2 + $0xa0] sm:$0xff] %v894
        %925 = vst [vmem:[#allocation2 + $0xa8] sm:$0xff] %v895
        %926 = vst [vmem:[#allocation2 + $0xb0] sm:$0xff] %v896
        %927 = vst [vmem:[#allocation2 + $0xb8] sm:$0xff] %v897
        %928 = vst [vmem:[#allocation2 + $0xc0] sm:$0xff] %v898
        %929 = vst [vmem:[#allocation2 + $0xc8] sm:$0xff] %v899
        %930 = vst [vmem:[#allocation2 + $0xd0] sm:$0xff] %v900
        %931 = vst [vmem:[#allocation2 + $0xd8] sm:$0xff] %v901
        %932 = vst [vmem:[#allocation2 + $0xe0] sm:$0xff] %v902
        %933 = vst [vmem:[#allocation2 + $0xe8] sm:$0xff] %v903
        %934 = vst [vmem:[#allocation2] sm:$0x1] 0.0
        %935 = vst [vmem:[#allocation2 + $0x18] sm:$0x1] 0.0
        %936 = vst [vmem:[#allocation2 + $0x30] sm:$0x1] 0.0
        %937 = vst [vmem:[#allocation2 + $0x48] sm:$0x1] 0.0
        %938 = vst [vmem:[#allocation2 + $0x60] sm:$0x1] 0.0
        %939 = vst [vmem:[#allocation2 + $0x78] sm:$0x1] 0.0
        %940 = vst [vmem:[#allocation2 + $0x90] sm:$0x1] 0.0
        %941 = vst [vmem:[#allocation2 + $0xa8] sm:$0x1] 0.0
        %942 = vst [vmem:[#allocation2 + $0xc0] sm:$0x1] 0.0
        %943 = vst [vmem:[#allocation2 + $0xd8] sm:$0x1] 0.0
        %944 = vst [vmem:[#allocation2 + $0x11] sm:$0x1] 0.0
        %945 = vst [vmem:[#allocation2 + $0x29] sm:$0x1] 0.0
        %946 = vst [vmem:[#allocation2 + $0x41] sm:$0x1] 0.0
        %947 = vst [vmem:[#allocation2 + $0x59] sm:$0x1] 0.0
        %948 = vst [vmem:[#allocation2 + $0x71] sm:$0x1] 0.0
        %949 = vst [vmem:[#allocation2 + $0x89] sm:$0x1] 0.0
        %950 = vst [vmem:[#allocation2 + $0xa1] sm:$0x1] 0.0
        %951 = vst [vmem:[#allocation2 + $0xb9] sm:$0x1] 0.0
        %952 = vst [vmem:[#allocation2 + $0xd1] sm:$0x1] 0.0
        %953 = vst [vmem:[#allocation2 + $0xe9] sm:$0x1] 0.0
        %p954 = scmp.eq.s32.totalorder %s506, 0
        // Predicated region
        $region85: #{tpu_custom_call.1} parent=63 // pred_check
          %p955 = pneg %p954
        $region86: #{tpu_custom_call.1} parent=63 // pred_check_branch
          %957 = sbr.rel (%p955) target = $region88
        $region87: #{tpu_custom_call.1} parent=63 // pred_region
          %958 = vst [vmem:[#allocation2] sm:$0xff] 0.0
          %959 = vst [vmem:[#allocation2 + $0x8] sm:$0xff] 0.0
          %960 = vst [vmem:[#allocation2 + $0x10] sm:$0xff] 0.0
        $region88: #{tpu_custom_call.1} parent=63 // pred_fallthru
          _
        %s961 = sadd.s32 %s506, 10
        %p962 = scmp.eq.s32.totalorder %s961, 18
        // Predicated region
        $region89: #{tpu_custom_call.1} parent=63 // pred_check
          %p963 = pneg %p962
        $region90: #{tpu_custom_call.1} parent=63 // pred_check_branch
          %965 = sbr.rel (%p963) target = $region92
        $region91: #{tpu_custom_call.1} parent=63 // pred_region
          %s966 = scalar_lea.vmem [#allocation2], 216
          %967 = vst [vmem:[%s966] sm:$0xff] 0.0
          %968 = vst [vmem:[%s966 + $0x8] sm:$0xff] 0.0
          %969 = vst [vmem:[%s966 + $0x10] sm:$0xff] 0.0
        $region92: #{tpu_custom_call.1} parent=63 // pred_fallthru
          _
        %v970 = vld [vmem:[#allocation8] sm:$0xff]
        %v971 = vld [vmem:[#allocation8 + $0x8] sm:$0x1]
        %v972 = vld [vmem:[#allocation2] sm:$0xff]
        %v973 = vld [vmem:[#allocation2 + $0x8] sm:$0xff]
        %v974 = vld [vmem:[#allocation2 + $0x18] sm:$0xff]
        %v975 = vld [vmem:[#allocation2 + $0x20] sm:$0xff]
        %v976 = vld [vmem:[#allocation2 + $0x30] sm:$0xff]
        %v977 = vld [vmem:[#allocation2 + $0x38] sm:$0xff]
        %v978 = vld [vmem:[#allocation2 + $0x48] sm:$0xff]
        %v979 = vld [vmem:[#allocation2 + $0x50] sm:$0xff]
        %v980 = vld [vmem:[#allocation2 + $0x60] sm:$0xff]
        %v981 = vld [vmem:[#allocation2 + $0x68] sm:$0xff]
        %v982 = vld [vmem:[#allocation2 + $0x78] sm:$0xff]
        %v983 = vld [vmem:[#allocation2 + $0x80] sm:$0xff]
        %v984 = vld [vmem:[#allocation2 + $0x90] sm:$0xff]
        %v985 = vld [vmem:[#allocation2 + $0x98] sm:$0xff]
        %v986 = vld [vmem:[#allocation2 + $0xa8] sm:$0xff]
        %v987 = vld [vmem:[#allocation2 + $0xb0] sm:$0xff]
        %v988 = vlaneseq
        %v989 = vshrl.u32 %v988, 7
        %v990 = vsub.s32 0, %v989
        %v991 = vrot.slane %v970, %v990
        %v992 = vmul.f32 %v972, %v991
        %v993 = vmul.f32 %v973, %v991
        %v994 = vmul.f32 %v974, %v991
        %v995 = vmul.f32 %v975, %v991
        %v996 = vmul.f32 %v976, %v991
        %v997 = vmul.f32 %v977, %v991
        %v998 = vmul.f32 %v978, %v991
        %v999 = vmul.f32 %v979, %v991
        %v1000 = vmul.f32 %v980, %v991
        %v1001 = vmul.f32 %v981, %v991
        %v1002 = vmul.f32 %v982, %v991
        %v1003 = vmul.f32 %v983, %v991
        %v1004 = vmul.f32 %v984, %v991
        %v1005 = vmul.f32 %v985, %v991
        %v1006 = vmul.f32 %v986, %v991
        %v1007 = vmul.f32 %v987, %v991
        %v1008 = vadd.f32 %v992, 0.0
        %v1009 = vadd.f32 %v993, 0.0
        %v1010 = vadd.f32 %v994, 0.0
        %v1011 = vadd.f32 %v995, 0.0
        %v1012 = vadd.f32 %v996, 0.0
        %v1013 = vadd.f32 %v997, 0.0
        %v1014 = vadd.f32 %v998, 0.0
        %v1015 = vadd.f32 %v999, 0.0
        %v1016 = vadd.f32 %v1000, 0.0
        %v1017 = vadd.f32 %v1001, 0.0
        %v1018 = vadd.f32 %v1002, 0.0
        %v1019 = vadd.f32 %v1003, 0.0
        %v1020 = vadd.f32 %v1004, 0.0
        %v1021 = vadd.f32 %v1005, 0.0
        %v1022 = vadd.f32 %v1006, 0.0
        %v1023 = vadd.f32 %v1007, 0.0
        %v1024 = vld [vmem:[#allocation2 + $0x1] sm:$0xff]
        %v1025 = vld [vmem:[#allocation2 + $0x9] sm:$0xff]
        %v1026 = vld [vmem:[#allocation2 + $0x19] sm:$0xff]
        %v1027 = vld [vmem:[#allocation2 + $0x21] sm:$0xff]
        %v1028 = vld [vmem:[#allocation2 + $0x31] sm:$0xff]
        %v1029 = vld [vmem:[#allocation2 + $0x39] sm:$0xff]
        %v1030 = vld [vmem:[#allocation2 + $0x49] sm:$0xff]
        %v1031 = vld [vmem:[#allocation2 + $0x51] sm:$0xff]
        %v1032 = vld [vmem:[#allocation2 + $0x61] sm:$0xff]
        %v1033 = vld [vmem:[#allocation2 + $0x69] sm:$0xff]
        %v1034 = vld [vmem:[#allocation2 + $0x79] sm:$0xff]
        %v1035 = vld [vmem:[#allocation2 + $0x81] sm:$0xff]
        %v1036 = vld [vmem:[#allocation2 + $0x91] sm:$0xff]
        %v1037 = vld [vmem:[#allocation2 + $0x99] sm:$0xff]
        %v1038 = vld [vmem:[#allocation2 + $0xa9] sm:$0xff]
        %v1039 = vld [vmem:[#allocation2 + $0xb1] sm:$0xff]
        %v1040 = vlaneseq
        %v1041 = vshrl.u32 %v1040, 7
        %v1042 = vsub.s32 1, %v1041
        %v1043 = vrot.slane %v970, %v1042
        %v1044 = vmul.f32 %v1024, %v1043
        %v1045 = vmul.f32 %v1025, %v1043
        %v1046 = vmul.f32 %v1026, %v1043
        %v1047 = vmul.f32 %v1027, %v1043
        %v1048 = vmul.f32 %v1028, %v1043
        %v1049 = vmul.f32 %v1029, %v1043
        %v1050 = vmul.f32 %v1030, %v1043
        %v1051 = vmul.f32 %v1031, %v1043
        %v1052 = vmul.f32 %v1032, %v1043
        %v1053 = vmul.f32 %v1033, %v1043
        %v1054 = vmul.f32 %v1034, %v1043
        %v1055 = vmul.f32 %v1035, %v1043
        %v1056 = vmul.f32 %v1036, %v1043
        %v1057 = vmul.f32 %v1037, %v1043
        %v1058 = vmul.f32 %v1038, %v1043
        %v1059 = vmul.f32 %v1039, %v1043
        %v1060 = vadd.f32 %v1008, %v1044
        %v1061 = vadd.f32 %v1009, %v1045
        %v1062 = vadd.f32 %v1010, %v1046
        %v1063 = vadd.f32 %v1011, %v1047
        %v1064 = vadd.f32 %v1012, %v1048
        %v1065 = vadd.f32 %v1013, %v1049
        %v1066 = vadd.f32 %v1014, %v1050
        %v1067 = vadd.f32 %v1015, %v1051
        %v1068 = vadd.f32 %v1016, %v1052
        %v1069 = vadd.f32 %v1017, %v1053
        %v1070 = vadd.f32 %v1018, %v1054
        %v1071 = vadd.f32 %v1019, %v1055
        %v1072 = vadd.f32 %v1020, %v1056
        %v1073 = vadd.f32 %v1021, %v1057
        %v1074 = vadd.f32 %v1022, %v1058
        %v1075 = vadd.f32 %v1023, %v1059
        %v1076 = vld [vmem:[#allocation2 + $0x2] sm:$0xff]
        %v1077 = vld [vmem:[#allocation2 + $0xa] sm:$0xff]
        %v1078 = vld [vmem:[#allocation2 + $0x1a] sm:$0xff]
        %v1079 = vld [vmem:[#allocation2 + $0x22] sm:$0xff]
        %v1080 = vld [vmem:[#allocation2 + $0x32] sm:$0xff]
        %v1081 = vld [vmem:[#allocation2 + $0x3a] sm:$0xff]
        %v1082 = vld [vmem:[#allocation2 + $0x4a] sm:$0xff]
        %v1083 = vld [vmem:[#allocation2 + $0x52] sm:$0xff]
        %v1084 = vld [vmem:[#allocation2 + $0x62] sm:$0xff]
        %v1085 = vld [vmem:[#allocation2 + $0x6a] sm:$0xff]
        %v1086 = vld [vmem:[#allocation2 + $0x7a] sm:$0xff]
        %v1087 = vld [vmem:[#allocation2 + $0x82] sm:$0xff]
        %v1088 = vld [vmem:[#allocation2 + $0x92] sm:$0xff]
        %v1089 = vld [vmem:[#allocation2 + $0x9a] sm:$0xff]
        %v1090 = vld [vmem:[#allocation2 + $0xaa] sm:$0xff]
        %v1091 = vld [vmem:[#allocation2 + $0xb2] sm:$0xff]
        %v1092 = vlaneseq
        %v1093 = vshrl.u32 %v1092, 7
        %v1094 = vsub.s32 2, %v1093
        %v1095 = vrot.slane %v970, %v1094
        %v1096 = vmul.f32 %v1076, %v1095
        %v1097 = vmul.f32 %v1077, %v1095
        %v1098 = vmul.f32 %v1078, %v1095
        %v1099 = vmul.f32 %v1079, %v1095
        %v1100 = vmul.f32 %v1080, %v1095
        %v1101 = vmul.f32 %v1081, %v1095
        %v1102 = vmul.f32 %v1082, %v1095
        %v1103 = vmul.f32 %v1083, %v1095
        %v1104 = vmul.f32 %v1084, %v1095
        %v1105 = vmul.f32 %v1085, %v1095
        %v1106 = vmul.f32 %v1086, %v1095
        %v1107 = vmul.f32 %v1087, %v1095
        %v1108 = vmul.f32 %v1088, %v1095
        %v1109 = vmul.f32 %v1089, %v1095
        %v1110 = vmul.f32 %v1090, %v1095
        %v1111 = vmul.f32 %v1091, %v1095
        %v1112 = vadd.f32 %v1060, %v1096
        %v1113 = vadd.f32 %v1061, %v1097
        %v1114 = vadd.f32 %v1062, %v1098
        %v1115 = vadd.f32 %v1063, %v1099
        %v1116 = vadd.f32 %v1064, %v1100
        %v1117 = vadd.f32 %v1065, %v1101
        %v1118 = vadd.f32 %v1066, %v1102
        %v1119 = vadd.f32 %v1067, %v1103
        %v1120 = vadd.f32 %v1068, %v1104
        %v1121 = vadd.f32 %v1069, %v1105
        %v1122 = vadd.f32 %v1070, %v1106
        %v1123 = vadd.f32 %v1071, %v1107
        %v1124 = vadd.f32 %v1072, %v1108
        %v1125 = vadd.f32 %v1073, %v1109
        %v1126 = vadd.f32 %v1074, %v1110
        %v1127 = vadd.f32 %v1075, %v1111
        %s1128 = scalar_lea.vmem [#allocation2], 24
        %v1129 = vld [vmem:[%s1128] sm:$0xff]
        %v1130 = vld [vmem:[%s1128 + $0x8] sm:$0xff]
        %v1131 = vld [vmem:[%s1128 + $0x18] sm:$0xff]
        %v1132 = vld [vmem:[%s1128 + $0x20] sm:$0xff]
        %v1133 = vld [vmem:[%s1128 + $0x30] sm:$0xff]
        %v1134 = vld [vmem:[%s1128 + $0x38] sm:$0xff]
        %v1135 = vld [vmem:[%s1128 + $0x48] sm:$0xff]
        %v1136 = vld [vmem:[%s1128 + $0x50] sm:$0xff]
        %v1137 = vld [vmem:[%s1128 + $0x60] sm:$0xff]
        %v1138 = vld [vmem:[%s1128 + $0x68] sm:$0xff]
        %v1139 = vld [vmem:[%s1128 + $0x78] sm:$0xff]
        %v1140 = vld [vmem:[%s1128 + $0x80] sm:$0xff]
        %v1141 = vld [vmem:[%s1128 + $0x90] sm:$0xff]
        %v1142 = vld [vmem:[%s1128 + $0x98] sm:$0xff]
        %v1143 = vld [vmem:[%s1128 + $0xa8] sm:$0xff]
        %v1144 = vld [vmem:[%s1128 + $0xb0] sm:$0xff]
        %v1145 = vlaneseq
        %v1146 = vshrl.u32 %v1145, 7
        %v1147 = vsub.s32 3, %v1146
        %v1148 = vrot.slane %v970, %v1147
        %v1149 = vmul.f32 %v1129, %v1148
        %v1150 = vmul.f32 %v1130, %v1148
        %v1151 = vmul.f32 %v1131, %v1148
        %v1152 = vmul.f32 %v1132, %v1148
        %v1153 = vmul.f32 %v1133, %v1148
        %v1154 = vmul.f32 %v1134, %v1148
        %v1155 = vmul.f32 %v1135, %v1148
        %v1156 = vmul.f32 %v1136, %v1148
        %v1157 = vmul.f32 %v1137, %v1148
        %v1158 = vmul.f32 %v1138, %v1148
        %v1159 = vmul.f32 %v1139, %v1148
        %v1160 = vmul.f32 %v1140, %v1148
        %v1161 = vmul.f32 %v1141, %v1148
        %v1162 = vmul.f32 %v1142, %v1148
        %v1163 = vmul.f32 %v1143, %v1148
        %v1164 = vmul.f32 %v1144, %v1148
        %v1165 = vadd.f32 %v1112, %v1149
        %v1166 = vadd.f32 %v1113, %v1150
        %v1167 = vadd.f32 %v1114, %v1151
        %v1168 = vadd.f32 %v1115, %v1152
        %v1169 = vadd.f32 %v1116, %v1153
        %v1170 = vadd.f32 %v1117, %v1154
        %v1171 = vadd.f32 %v1118, %v1155
        %v1172 = vadd.f32 %v1119, %v1156
        %v1173 = vadd.f32 %v1120, %v1157
        %v1174 = vadd.f32 %v1121, %v1158
        %v1175 = vadd.f32 %v1122, %v1159
        %v1176 = vadd.f32 %v1123, %v1160
        %v1177 = vadd.f32 %v1124, %v1161
        %v1178 = vadd.f32 %v1125, %v1162
        %v1179 = vadd.f32 %v1126, %v1163
        %v1180 = vadd.f32 %v1127, %v1164
        %v1181 = vld [vmem:[%s1128 + $0x1] sm:$0xff]
        %v1182 = vld [vmem:[%s1128 + $0x9] sm:$0xff]
        %v1183 = vld [vmem:[%s1128 + $0x19] sm:$0xff]
        %v1184 = vld [vmem:[%s1128 + $0x21] sm:$0xff]
        %v1185 = vld [vmem:[%s1128 + $0x31] sm:$0xff]
        %v1186 = vld [vmem:[%s1128 + $0x39] sm:$0xff]
        %v1187 = vld [vmem:[%s1128 + $0x49] sm:$0xff]
        %v1188 = vld [vmem:[%s1128 + $0x51] sm:$0xff]
        %v1189 = vld [vmem:[%s1128 + $0x61] sm:$0xff]
        %v1190 = vld [vmem:[%s1128 + $0x69] sm:$0xff]
        %v1191 = vld [vmem:[%s1128 + $0x79] sm:$0xff]
        %v1192 = vld [vmem:[%s1128 + $0x81] sm:$0xff]
        %v1193 = vld [vmem:[%s1128 + $0x91] sm:$0xff]
        %v1194 = vld [vmem:[%s1128 + $0x99] sm:$0xff]
        %v1195 = vld [vmem:[%s1128 + $0xa9] sm:$0xff]
        %v1196 = vld [vmem:[%s1128 + $0xb1] sm:$0xff]
        %v1197 = vlaneseq
        %v1198 = vshrl.u32 %v1197, 7
        %v1199 = vsub.s32 4, %v1198
        %v1200 = vrot.slane %v970, %v1199
        %v1201 = vmul.f32 %v1181, %v1200
        %v1202 = vmul.f32 %v1182, %v1200
        %v1203 = vmul.f32 %v1183, %v1200
        %v1204 = vmul.f32 %v1184, %v1200
        %v1205 = vmul.f32 %v1185, %v1200
        %v1206 = vmul.f32 %v1186, %v1200
        %v1207 = vmul.f32 %v1187, %v1200
        %v1208 = vmul.f32 %v1188, %v1200
        %v1209 = vmul.f32 %v1189, %v1200
        %v1210 = vmul.f32 %v1190, %v1200
        %v1211 = vmul.f32 %v1191, %v1200
        %v1212 = vmul.f32 %v1192, %v1200
        %v1213 = vmul.f32 %v1193, %v1200
        %v1214 = vmul.f32 %v1194, %v1200
        %v1215 = vmul.f32 %v1195, %v1200
        %v1216 = vmul.f32 %v1196, %v1200
        %v1217 = vadd.f32 %v1165, %v1201
        %v1218 = vadd.f32 %v1166, %v1202
        %v1219 = vadd.f32 %v1167, %v1203
        %v1220 = vadd.f32 %v1168, %v1204
        %v1221 = vadd.f32 %v1169, %v1205
        %v1222 = vadd.f32 %v1170, %v1206
        %v1223 = vadd.f32 %v1171, %v1207
        %v1224 = vadd.f32 %v1172, %v1208
        %v1225 = vadd.f32 %v1173, %v1209
        %v1226 = vadd.f32 %v1174, %v1210
        %v1227 = vadd.f32 %v1175, %v1211
        %v1228 = vadd.f32 %v1176, %v1212
        %v1229 = vadd.f32 %v1177, %v1213
        %v1230 = vadd.f32 %v1178, %v1214
        %v1231 = vadd.f32 %v1179, %v1215
        %v1232 = vadd.f32 %v1180, %v1216
        %v1233 = vld [vmem:[%s1128 + $0x2] sm:$0xff]
        %v1234 = vld [vmem:[%s1128 + $0xa] sm:$0xff]
        %v1235 = vld [vmem:[%s1128 + $0x1a] sm:$0xff]
        %v1236 = vld [vmem:[%s1128 + $0x22] sm:$0xff]
        %v1237 = vld [vmem:[%s1128 + $0x32] sm:$0xff]
        %v1238 = vld [vmem:[%s1128 + $0x3a] sm:$0xff]
        %v1239 = vld [vmem:[%s1128 + $0x4a] sm:$0xff]
        %v1240 = vld [vmem:[%s1128 + $0x52] sm:$0xff]
        %v1241 = vld [vmem:[%s1128 + $0x62] sm:$0xff]
        %v1242 = vld [vmem:[%s1128 + $0x6a] sm:$0xff]
        %v1243 = vld [vmem:[%s1128 + $0x7a] sm:$0xff]
        %v1244 = vld [vmem:[%s1128 + $0x82] sm:$0xff]
        %v1245 = vld [vmem:[%s1128 + $0x92] sm:$0xff]
        %v1246 = vld [vmem:[%s1128 + $0x9a] sm:$0xff]
        %v1247 = vld [vmem:[%s1128 + $0xaa] sm:$0xff]
        %v1248 = vld [vmem:[%s1128 + $0xb2] sm:$0xff]
        %v1249 = vlaneseq
        %v1250 = vshrl.u32 %v1249, 7
        %v1251 = vsub.s32 5, %v1250
        %v1252 = vrot.slane %v970, %v1251
        %v1253 = vmul.f32 %v1233, %v1252
        %v1254 = vmul.f32 %v1234, %v1252
        %v1255 = vmul.f32 %v1235, %v1252
        %v1256 = vmul.f32 %v1236, %v1252
        %v1257 = vmul.f32 %v1237, %v1252
        %v1258 = vmul.f32 %v1238, %v1252
        %v1259 = vmul.f32 %v1239, %v1252
        %v1260 = vmul.f32 %v1240, %v1252
        %v1261 = vmul.f32 %v1241, %v1252
        %v1262 = vmul.f32 %v1242, %v1252
        %v1263 = vmul.f32 %v1243, %v1252
        %v1264 = vmul.f32 %v1244, %v1252
        %v1265 = vmul.f32 %v1245, %v1252
        %v1266 = vmul.f32 %v1246, %v1252
        %v1267 = vmul.f32 %v1247, %v1252
        %v1268 = vmul.f32 %v1248, %v1252
        %v1269 = vadd.f32 %v1217, %v1253
        %v1270 = vadd.f32 %v1218, %v1254
        %v1271 = vadd.f32 %v1219, %v1255
        %v1272 = vadd.f32 %v1220, %v1256
        %v1273 = vadd.f32 %v1221, %v1257
        %v1274 = vadd.f32 %v1222, %v1258
        %v1275 = vadd.f32 %v1223, %v1259
        %v1276 = vadd.f32 %v1224, %v1260
        %v1277 = vadd.f32 %v1225, %v1261
        %v1278 = vadd.f32 %v1226, %v1262
        %v1279 = vadd.f32 %v1227, %v1263
        %v1280 = vadd.f32 %v1228, %v1264
        %v1281 = vadd.f32 %v1229, %v1265
        %v1282 = vadd.f32 %v1230, %v1266
        %v1283 = vadd.f32 %v1231, %v1267
        %v1284 = vadd.f32 %v1232, %v1268
        %s1285 = scalar_lea.vmem [#allocation2], 48
        %v1286 = vld [vmem:[%s1285] sm:$0xff]
        %v1287 = vld [vmem:[%s1285 + $0x8] sm:$0xff]
        %v1288 = vld [vmem:[%s1285 + $0x18] sm:$0xff]
        %v1289 = vld [vmem:[%s1285 + $0x20] sm:$0xff]
        %v1290 = vld [vmem:[%s1285 + $0x30] sm:$0xff]
        %v1291 = vld [vmem:[%s1285 + $0x38] sm:$0xff]
        %v1292 = vld [vmem:[%s1285 + $0x48] sm:$0xff]
        %v1293 = vld [vmem:[%s1285 + $0x50] sm:$0xff]
        %v1294 = vld [vmem:[%s1285 + $0x60] sm:$0xff]
        %v1295 = vld [vmem:[%s1285 + $0x68] sm:$0xff]
        %v1296 = vld [vmem:[%s1285 + $0x78] sm:$0xff]
        %v1297 = vld [vmem:[%s1285 + $0x80] sm:$0xff]
        %v1298 = vld [vmem:[%s1285 + $0x90] sm:$0xff]
        %v1299 = vld [vmem:[%s1285 + $0x98] sm:$0xff]
        %v1300 = vld [vmem:[%s1285 + $0xa8] sm:$0xff]
        %v1301 = vld [vmem:[%s1285 + $0xb0] sm:$0xff]
        %v1302 = vlaneseq
        %v1303 = vshrl.u32 %v1302, 7
        %v1304 = vsub.s32 6, %v1303
        %v1305 = vrot.slane %v970, %v1304
        %v1306 = vmul.f32 %v1286, %v1305
        %v1307 = vmul.f32 %v1287, %v1305
        %v1308 = vmul.f32 %v1288, %v1305
        %v1309 = vmul.f32 %v1289, %v1305
        %v1310 = vmul.f32 %v1290, %v1305
        %v1311 = vmul.f32 %v1291, %v1305
        %v1312 = vmul.f32 %v1292, %v1305
        %v1313 = vmul.f32 %v1293, %v1305
        %v1314 = vmul.f32 %v1294, %v1305
        %v1315 = vmul.f32 %v1295, %v1305
        %v1316 = vmul.f32 %v1296, %v1305
        %v1317 = vmul.f32 %v1297, %v1305
        %v1318 = vmul.f32 %v1298, %v1305
        %v1319 = vmul.f32 %v1299, %v1305
        %v1320 = vmul.f32 %v1300, %v1305
        %v1321 = vmul.f32 %v1301, %v1305
        %v1322 = vadd.f32 %v1269, %v1306
        %v1323 = vadd.f32 %v1270, %v1307
        %v1324 = vadd.f32 %v1271, %v1308
        %v1325 = vadd.f32 %v1272, %v1309
        %v1326 = vadd.f32 %v1273, %v1310
        %v1327 = vadd.f32 %v1274, %v1311
        %v1328 = vadd.f32 %v1275, %v1312
        %v1329 = vadd.f32 %v1276, %v1313
        %v1330 = vadd.f32 %v1277, %v1314
        %v1331 = vadd.f32 %v1278, %v1315
        %v1332 = vadd.f32 %v1279, %v1316
        %v1333 = vadd.f32 %v1280, %v1317
        %v1334 = vadd.f32 %v1281, %v1318
        %v1335 = vadd.f32 %v1282, %v1319
        %v1336 = vadd.f32 %v1283, %v1320
        %v1337 = vadd.f32 %v1284, %v1321
        %v1338 = vld [vmem:[%s1285 + $0x1] sm:$0xff]
        %v1339 = vld [vmem:[%s1285 + $0x9] sm:$0xff]
        %v1340 = vld [vmem:[%s1285 + $0x19] sm:$0xff]
        %v1341 = vld [vmem:[%s1285 + $0x21] sm:$0xff]
        %v1342 = vld [vmem:[%s1285 + $0x31] sm:$0xff]
        %v1343 = vld [vmem:[%s1285 + $0x39] sm:$0xff]
        %v1344 = vld [vmem:[%s1285 + $0x49] sm:$0xff]
        %v1345 = vld [vmem:[%s1285 + $0x51] sm:$0xff]
        %v1346 = vld [vmem:[%s1285 + $0x61] sm:$0xff]
        %v1347 = vld [vmem:[%s1285 + $0x69] sm:$0xff]
        %v1348 = vld [vmem:[%s1285 + $0x79] sm:$0xff]
        %v1349 = vld [vmem:[%s1285 + $0x81] sm:$0xff]
        %v1350 = vld [vmem:[%s1285 + $0x91] sm:$0xff]
        %v1351 = vld [vmem:[%s1285 + $0x99] sm:$0xff]
        %v1352 = vld [vmem:[%s1285 + $0xa9] sm:$0xff]
        %v1353 = vld [vmem:[%s1285 + $0xb1] sm:$0xff]
        %v1354 = vlaneseq
        %v1355 = vshrl.u32 %v1354, 7
        %v1356 = vsub.s32 7, %v1355
        %v1357 = vrot.slane %v970, %v1356
        %v1358 = vmul.f32 %v1338, %v1357
        %v1359 = vmul.f32 %v1339, %v1357
        %v1360 = vmul.f32 %v1340, %v1357
        %v1361 = vmul.f32 %v1341, %v1357
        %v1362 = vmul.f32 %v1342, %v1357
        %v1363 = vmul.f32 %v1343, %v1357
        %v1364 = vmul.f32 %v1344, %v1357
        %v1365 = vmul.f32 %v1345, %v1357
        %v1366 = vmul.f32 %v1346, %v1357
        %v1367 = vmul.f32 %v1347, %v1357
        %v1368 = vmul.f32 %v1348, %v1357
        %v1369 = vmul.f32 %v1349, %v1357
        %v1370 = vmul.f32 %v1350, %v1357
        %v1371 = vmul.f32 %v1351, %v1357
        %v1372 = vmul.f32 %v1352, %v1357
        %v1373 = vmul.f32 %v1353, %v1357
        %v1374 = vadd.f32 %v1322, %v1358
        %v1375 = vadd.f32 %v1323, %v1359
        %v1376 = vadd.f32 %v1324, %v1360
        %v1377 = vadd.f32 %v1325, %v1361
        %v1378 = vadd.f32 %v1326, %v1362
        %v1379 = vadd.f32 %v1327, %v1363
        %v1380 = vadd.f32 %v1328, %v1364
        %v1381 = vadd.f32 %v1329, %v1365
        %v1382 = vadd.f32 %v1330, %v1366
        %v1383 = vadd.f32 %v1331, %v1367
        %v1384 = vadd.f32 %v1332, %v1368
        %v1385 = vadd.f32 %v1333, %v1369
        %v1386 = vadd.f32 %v1334, %v1370
        %v1387 = vadd.f32 %v1335, %v1371
        %v1388 = vadd.f32 %v1336, %v1372
        %v1389 = vadd.f32 %v1337, %v1373
        %v1390 = vld [vmem:[%s1285 + $0x2] sm:$0xff]
        %v1391 = vld [vmem:[%s1285 + $0xa] sm:$0xff]
        %v1392 = vld [vmem:[%s1285 + $0x1a] sm:$0xff]
        %v1393 = vld [vmem:[%s1285 + $0x22] sm:$0xff]
        %v1394 = vld [vmem:[%s1285 + $0x32] sm:$0xff]
        %v1395 = vld [vmem:[%s1285 + $0x3a] sm:$0xff]
        %v1396 = vld [vmem:[%s1285 + $0x4a] sm:$0xff]
        %v1397 = vld [vmem:[%s1285 + $0x52] sm:$0xff]
        %v1398 = vld [vmem:[%s1285 + $0x62] sm:$0xff]
        %v1399 = vld [vmem:[%s1285 + $0x6a] sm:$0xff]
        %v1400 = vld [vmem:[%s1285 + $0x7a] sm:$0xff]
        %v1401 = vld [vmem:[%s1285 + $0x82] sm:$0xff]
        %v1402 = vld [vmem:[%s1285 + $0x92] sm:$0xff]
        %v1403 = vld [vmem:[%s1285 + $0x9a] sm:$0xff]
        %v1404 = vld [vmem:[%s1285 + $0xaa] sm:$0xff]
        %v1405 = vld [vmem:[%s1285 + $0xb2] sm:$0xff]
        %v1406 = vlaneseq
        %v1407 = vshrl.u32 %v1406, 7
        %v1408 = vsub.s32 0, %v1407
        %v1409 = vrot.slane %v971, %v1408
        %v1410 = vmul.f32 %v1390, %v1409
        %v1411 = vmul.f32 %v1391, %v1409
        %v1412 = vmul.f32 %v1392, %v1409
        %v1413 = vmul.f32 %v1393, %v1409
        %v1414 = vmul.f32 %v1394, %v1409
        %v1415 = vmul.f32 %v1395, %v1409
        %v1416 = vmul.f32 %v1396, %v1409
        %v1417 = vmul.f32 %v1397, %v1409
        %v1418 = vmul.f32 %v1398, %v1409
        %v1419 = vmul.f32 %v1399, %v1409
        %v1420 = vmul.f32 %v1400, %v1409
        %v1421 = vmul.f32 %v1401, %v1409
        %v1422 = vmul.f32 %v1402, %v1409
        %v1423 = vmul.f32 %v1403, %v1409
        %v1424 = vmul.f32 %v1404, %v1409
        %v1425 = vmul.f32 %v1405, %v1409
        %v1426 = vadd.f32 %v1374, %v1410
        %v1427 = vadd.f32 %v1375, %v1411
        %v1428 = vadd.f32 %v1376, %v1412
        %v1429 = vadd.f32 %v1377, %v1413
        %v1430 = vadd.f32 %v1378, %v1414
        %v1431 = vadd.f32 %v1379, %v1415
        %v1432 = vadd.f32 %v1380, %v1416
        %v1433 = vadd.f32 %v1381, %v1417
        %v1434 = vadd.f32 %v1382, %v1418
        %v1435 = vadd.f32 %v1383, %v1419
        %v1436 = vadd.f32 %v1384, %v1420
        %v1437 = vadd.f32 %v1385, %v1421
        %v1438 = vadd.f32 %v1386, %v1422
        %v1439 = vadd.f32 %v1387, %v1423
        %v1440 = vadd.f32 %v1388, %v1424
        %v1441 = vadd.f32 %v1389, %v1425
        %v1442 = vld [vmem:[%s5] sm:$0x1]
        %v1444 = vlaneseq
        %v1445 = vshrl.u32 %v1444, 7
        %v1446 = vsub.s32 0, %v1445
        %v1447 = vrot.slane %v1442, %v1446
        %v1449 = vmul.f32 %v1426, %v1447
        %v1450 = vmul.f32 %v1427, %v1447
        %v1451 = vmul.f32 %v1428, %v1447
        %v1452 = vmul.f32 %v1429, %v1447
        %v1453 = vmul.f32 %v1430, %v1447
        %v1454 = vmul.f32 %v1431, %v1447
        %v1455 = vmul.f32 %v1432, %v1447
        %v1456 = vmul.f32 %v1433, %v1447
        %v1457 = vmul.f32 %v1434, %v1447
        %v1458 = vmul.f32 %v1435, %v1447
        %v1459 = vmul.f32 %v1436, %v1447
        %v1460 = vmul.f32 %v1437, %v1447
        %v1461 = vmul.f32 %v1438, %v1447
        %v1462 = vmul.f32 %v1439, %v1447
        %v1463 = vmul.f32 %v1440, %v1447
        %v1464 = vmul.f32 %v1441, %v1447
        %v1465 = vld [vmem:[%s6] sm:$0x1]
        %v1467 = vlaneseq
        %v1468 = vshrl.u32 %v1467, 7
        %v1469 = vsub.s32 0, %v1468
        %v1470 = vrot.slane %v1465, %v1469
        %v1472 = vadd.f32 %v1449, %v1470
        %v1473 = vadd.f32 %v1450, %v1470
        %v1474 = vadd.f32 %v1451, %v1470
        %v1475 = vadd.f32 %v1452, %v1470
        %v1476 = vadd.f32 %v1453, %v1470
        %v1477 = vadd.f32 %v1454, %v1470
        %v1478 = vadd.f32 %v1455, %v1470
        %v1479 = vadd.f32 %v1456, %v1470
        %v1480 = vadd.f32 %v1457, %v1470
        %v1481 = vadd.f32 %v1458, %v1470
        %v1482 = vadd.f32 %v1459, %v1470
        %v1483 = vadd.f32 %v1460, %v1470
        %v1484 = vadd.f32 %v1461, %v1470
        %v1485 = vadd.f32 %v1462, %v1470
        %v1486 = vadd.f32 %v1463, %v1470
        %v1487 = vadd.f32 %v1464, %v1470
        %v1488 = vmax.f32 %v1472, 0.0
        %v1489 = vmax.f32 %v1473, 0.0
        %v1490 = vmax.f32 %v1474, 0.0
        %v1491 = vmax.f32 %v1475, 0.0
        %v1492 = vmax.f32 %v1476, 0.0
        %v1493 = vmax.f32 %v1477, 0.0
        %v1494 = vmax.f32 %v1478, 0.0
        %v1495 = vmax.f32 %v1479, 0.0
        %v1496 = vmax.f32 %v1480, 0.0
        %v1497 = vmax.f32 %v1481, 0.0
        %v1498 = vmax.f32 %v1482, 0.0
        %v1499 = vmax.f32 %v1483, 0.0
        %v1500 = vmax.f32 %v1484, 0.0
        %v1501 = vmax.f32 %v1485, 0.0
        %v1502 = vmax.f32 %v1486, 0.0
        %v1503 = vmax.f32 %v1487, 0.0
        %v1504 = vmin.f32 %v1488, 6.0
        %v1505 = vmin.f32 %v1489, 6.0
        %v1506 = vmin.f32 %v1490, 6.0
        %v1507 = vmin.f32 %v1491, 6.0
        %v1508 = vmin.f32 %v1492, 6.0
        %v1509 = vmin.f32 %v1493, 6.0
        %v1510 = vmin.f32 %v1494, 6.0
        %v1511 = vmin.f32 %v1495, 6.0
        %v1512 = vmin.f32 %v1496, 6.0
        %v1513 = vmin.f32 %v1497, 6.0
        %v1514 = vmin.f32 %v1498, 6.0
        %v1515 = vmin.f32 %v1499, 6.0
        %v1516 = vmin.f32 %v1500, 6.0
        %v1517 = vmin.f32 %v1501, 6.0
        %v1518 = vmin.f32 %v1502, 6.0
        %v1519 = vmin.f32 %v1503, 6.0
        %v1520 = vld [vmem:[#allocation9] sm:$0xff]
        %v1521 = vld [vmem:[#allocation9 + $0x8] sm:$0xff]
        %v1522 = vld [vmem:[#allocation9 + $0x10] sm:$0xff]
        %v1523 = vld [vmem:[#allocation9 + $0x18] sm:$0xff]
        %v1524 = vld [vmem:[#allocation9 + $0x20] sm:$0xff]
        %v1525 = vld [vmem:[#allocation9 + $0x28] sm:$0xff]
        %v1526 = vld [vmem:[#allocation9 + $0x30] sm:$0xff]
        %v1527 = vld [vmem:[#allocation9 + $0x38] sm:$0xff]
        %v1528 = vld [vmem:[#allocation9 + $0x40] sm:$0xff]
        %v1529 = vld [vmem:[#allocation9 + $0x48] sm:$0xff]
        %v1530 = vld [vmem:[#allocation9 + $0x50] sm:$0xff]
        %v1531 = vld [vmem:[#allocation9 + $0x58] sm:$0xff]
        %v1532 = vld [vmem:[#allocation9 + $0x60] sm:$0xff]
        %v1533 = vld [vmem:[#allocation9 + $0x68] sm:$0xff]
        %v1534 = vld [vmem:[#allocation9 + $0x70] sm:$0xff]
        %v1535 = vld [vmem:[#allocation9 + $0x78] sm:$0xff]
        %1536 = vmatprep.subr.mxu0 0.0
        %1537 = vmatpush1.msra.mxu0 %v1535
        %1538 = vmatprep.subr.mxu0 0.0
        %1539 = vmatpush1.msra.mxu0 %v1534
        %1540 = vmatprep.subr.mxu0 0.0
        %1541 = vmatpush1.msra.mxu0 %v1533
        %1542 = vmatprep.subr.mxu0 0.0
        %1543 = vmatpush1.msra.mxu0 %v1532
        %1544 = vmatprep.subr.mxu0 0.0
        %1545 = vmatpush1.msra.mxu0 %v1531
        %1546 = vmatprep.subr.mxu0 0.0
        %1547 = vmatpush1.msra.mxu0 %v1530
        %1548 = vmatprep.subr.mxu0 0.0
        %1549 = vmatpush1.msra.mxu0 %v1529
        %1550 = vmatprep.subr.mxu0 0.0
        %1551 = vmatpush1.msra.mxu0 %v1528
        %1552 = vmatprep.subr.mxu0 0.0
        %1553 = vmatpush1.msra.mxu0 %v1527
        %1554 = vmatprep.subr.mxu0 0.0
        %1555 = vmatpush1.msra.mxu0 %v1526
        %1556 = vmatprep.subr.mxu0 0.0
        %1557 = vmatpush1.msra.mxu0 %v1525
        %1558 = vmatprep.subr.mxu0 0.0
        %1559 = vmatpush1.msra.mxu0 %v1524
        %1560 = vmatprep.subr.mxu0 0.0
        %1561 = vmatpush1.msra.mxu0 %v1523
        %1562 = vmatprep.subr.mxu0 0.0
        %1563 = vmatpush1.msra.mxu0 %v1522
        %1564 = vmatprep.subr.mxu0 0.0
        %1565 = vmatpush1.msra.mxu0 %v1521
        %1566 = vmatprep.subr.mxu0 0.0
        %1567 = vmatpush1.msra.mxu0 %v1520
        %1568 = vmatprep.subr.mxu0 0.0
        %1569 = vmatpush2.msra.mxu0 0.0
        %1570 = vmatprep.subr.mxu0 0.0
        %1571 = vmatpush2.msra.mxu0 0.0
        %1572 = vmatprep.subr.mxu0 0.0
        %1573 = vmatpush2.msra.mxu0 0.0
        %1574 = vmatprep.subr.mxu0 0.0
        %1575 = vmatpush2.msra.mxu0 0.0
        %1576 = vmatprep.subr.mxu0 0.0
        %1577 = vmatpush2.msra.mxu0 0.0
        %1578 = vmatprep.subr.mxu0 0.0
        %1579 = vmatpush2.msra.mxu0 0.0
        %1580 = vmatprep.subr.mxu0 0.0
        %1581 = vmatpush2.msra.mxu0 0.0
        %1582 = vmatprep.subr.mxu0 0.0
        %1583 = vmatpush2.msra.mxu0 0.0
        %1584 = vmatprep.subr.mxu0 0.0
        %1585 = vmatpush2.msra.mxu0 0.0
        %1586 = vmatprep.subr.mxu0 0.0
        %1587 = vmatpush2.msra.mxu0 0.0
        %1588 = vmatprep.subr.mxu0 0.0
        %1589 = vmatpush2.msra.mxu0 0.0
        %1590 = vmatprep.subr.mxu0 0.0
        %1591 = vmatpush2.msra.mxu0 0.0
        %1592 = vmatprep.subr.mxu0 0.0
        %1593 = vmatpush2.msra.mxu0 0.0
        %1594 = vmatprep.subr.mxu0 0.0
        %1595 = vmatpush2.msra.mxu0 0.0
        %1596 = vmatprep.subr.mxu0 0.0
        %1597 = vmatpush2.msra.mxu0 0.0
        %1598 = vmatprep.subr.mxu0 0.0
        %1599 = vmatpush2.msra.mxu0 0.0
        %1600 = vmatprep.mubr.f32.mxu0 0.0
        %1601 = vmatmul.mubr.f32.gmra.mxu0 %v1504
        %v1602 = vpop.f32.mrf.mxu0
        %v1603 = vadd.f32 0.0, %v1602
        %v1604 = vpop.f32.mrf.mxu0
        %1605 = vmatprep.mubr.f32.mxu0 0.0
        %1606 = vmatmul.mubr.f32.gmra.mxu0 %v1505
        %v1607 = vpop.f32.mrf.mxu0
        %v1608 = vadd.f32 0.0, %v1607
        %v1609 = vpop.f32.mrf.mxu0
        %1610 = vmatprep.mubr.f32.mxu0 0.0
        %1611 = vmatmul.mubr.f32.gmra.mxu0 %v1506
        %v1612 = vpop.f32.mrf.mxu0
        %v1613 = vadd.f32 0.0, %v1612
        %v1614 = vpop.f32.mrf.mxu0
        %1615 = vmatprep.mubr.f32.mxu0 0.0
        %1616 = vmatmul.mubr.f32.gmra.mxu0 %v1507
        %v1617 = vpop.f32.mrf.mxu0
        %v1618 = vadd.f32 0.0, %v1617
        %v1619 = vpop.f32.mrf.mxu0
        %1620 = vmatprep.mubr.f32.mxu0 0.0
        %1621 = vmatmul.mubr.f32.gmra.mxu0 %v1508
        %v1622 = vpop.f32.mrf.mxu0
        %v1623 = vadd.f32 0.0, %v1622
        %v1624 = vpop.f32.mrf.mxu0
        %1625 = vmatprep.mubr.f32.mxu0 0.0
        %1626 = vmatmul.mubr.f32.gmra.mxu0 %v1509
        %v1627 = vpop.f32.mrf.mxu0
        %v1628 = vadd.f32 0.0, %v1627
        %v1629 = vpop.f32.mrf.mxu0
        %1630 = vmatprep.mubr.f32.mxu0 0.0
        %1631 = vmatmul.mubr.f32.gmra.mxu0 %v1510
        %v1632 = vpop.f32.mrf.mxu0
        %v1633 = vadd.f32 0.0, %v1632
        %v1634 = vpop.f32.mrf.mxu0
        %1635 = vmatprep.mubr.f32.mxu0 0.0
        %1636 = vmatmul.mubr.f32.gmra.mxu0 %v1511
        %v1637 = vpop.f32.mrf.mxu0
        %v1638 = vadd.f32 0.0, %v1637
        %v1639 = vpop.f32.mrf.mxu0
        %1640 = vmatprep.mubr.f32.mxu0 0.0
        %1641 = vmatmul.mubr.f32.gmra.mxu0 %v1512
        %v1642 = vpop.f32.mrf.mxu0
        %v1643 = vadd.f32 0.0, %v1642
        %v1644 = vpop.f32.mrf.mxu0
        %1645 = vmatprep.mubr.f32.mxu0 0.0
        %1646 = vmatmul.mubr.f32.gmra.mxu0 %v1513
        %v1647 = vpop.f32.mrf.mxu0
        %v1648 = vadd.f32 0.0, %v1647
        %v1649 = vpop.f32.mrf.mxu0
        %1650 = vmatprep.mubr.f32.mxu0 0.0
        %1651 = vmatmul.mubr.f32.gmra.mxu0 %v1514
        %v1652 = vpop.f32.mrf.mxu0
        %v1653 = vadd.f32 0.0, %v1652
        %v1654 = vpop.f32.mrf.mxu0
        %1655 = vmatprep.mubr.f32.mxu0 0.0
        %1656 = vmatmul.mubr.f32.gmra.mxu0 %v1515
        %v1657 = vpop.f32.mrf.mxu0
        %v1658 = vadd.f32 0.0, %v1657
        %v1659 = vpop.f32.mrf.mxu0
        %1660 = vmatprep.mubr.f32.mxu0 0.0
        %1661 = vmatmul.mubr.f32.gmra.mxu0 %v1516
        %v1662 = vpop.f32.mrf.mxu0
        %v1663 = vadd.f32 0.0, %v1662
        %v1664 = vpop.f32.mrf.mxu0
        %1665 = vmatprep.mubr.f32.mxu0 0.0
        %1666 = vmatmul.mubr.f32.gmra.mxu0 %v1517
        %v1667 = vpop.f32.mrf.mxu0
        %v1668 = vadd.f32 0.0, %v1667
        %v1669 = vpop.f32.mrf.mxu0
        %1670 = vmatprep.mubr.f32.mxu0 0.0
        %1671 = vmatmul.mubr.f32.gmra.mxu0 %v1518
        %v1672 = vpop.f32.mrf.mxu0
        %v1673 = vadd.f32 0.0, %v1672
        %v1674 = vpop.f32.mrf.mxu0
        %1675 = vmatprep.mubr.f32.mxu0 0.0
        %1676 = vmatmul.mubr.f32.gmra.mxu0 %v1519
        %v1677 = vpop.f32.mrf.mxu0
        %v1678 = vadd.f32 0.0, %v1677
        %v1679 = vpop.f32.mrf.mxu0
        %1680 = vdwg.mxu0
        %v1681 = vld [vmem:[%s8] sm:$0x1]
        %v1683 = vlaneseq
        %v1684 = vshrl.u32 %v1683, 7
        %v1685 = vsub.s32 0, %v1684
        %v1686 = vrot.slane %v1681, %v1685
        %v1688 = vmul.f32 %v1603, %v1686
        %v1689 = vmul.f32 %v1608, %v1686
        %v1690 = vmul.f32 %v1613, %v1686
        %v1691 = vmul.f32 %v1618, %v1686
        %v1692 = vmul.f32 %v1623, %v1686
        %v1693 = vmul.f32 %v1628, %v1686
        %v1694 = vmul.f32 %v1633, %v1686
        %v1695 = vmul.f32 %v1638, %v1686
        %v1696 = vmul.f32 %v1643, %v1686
        %v1697 = vmul.f32 %v1648, %v1686
        %v1698 = vmul.f32 %v1653, %v1686
        %v1699 = vmul.f32 %v1658, %v1686
        %v1700 = vmul.f32 %v1663, %v1686
        %v1701 = vmul.f32 %v1668, %v1686
        %v1702 = vmul.f32 %v1673, %v1686
        %v1703 = vmul.f32 %v1678, %v1686
        %v1704 = vld [vmem:[%s9] sm:$0x1]
        %v1706 = vlaneseq
        %v1707 = vshrl.u32 %v1706, 7
        %v1708 = vsub.s32 0, %v1707
        %v1709 = vrot.slane %v1704, %v1708
        %v1711 = vadd.f32 %v1688, %v1709
        %v1712 = vadd.f32 %v1689, %v1709
        %v1713 = vadd.f32 %v1690, %v1709
        %v1714 = vadd.f32 %v1691, %v1709
        %v1715 = vadd.f32 %v1692, %v1709
        %v1716 = vadd.f32 %v1693, %v1709
        %v1717 = vadd.f32 %v1694, %v1709
        %v1718 = vadd.f32 %v1695, %v1709
        %v1719 = vadd.f32 %v1696, %v1709
        %v1720 = vadd.f32 %v1697, %v1709
        %v1721 = vadd.f32 %v1698, %v1709
        %v1722 = vadd.f32 %v1699, %v1709
        %v1723 = vadd.f32 %v1700, %v1709
        %v1724 = vadd.f32 %v1701, %v1709
        %v1725 = vadd.f32 %v1702, %v1709
        %v1726 = vadd.f32 %v1703, %v1709
        %v1727 = vld [vmem:[%s460] sm:$0xff]
        %v1728 = vld [vmem:[%s460 + $0x8] sm:$0xff]
        %v1729 = vld [vmem:[%s460 + $0x10] sm:$0xff]
        %v1730 = vld [vmem:[%s460 + $0x18] sm:$0xff]
        %v1731 = vld [vmem:[%s460 + $0x20] sm:$0xff]
        %v1732 = vld [vmem:[%s460 + $0x28] sm:$0xff]
        %v1733 = vld [vmem:[%s460 + $0x30] sm:$0xff]
        %v1734 = vld [vmem:[%s460 + $0x38] sm:$0xff]
        %v1735 = vld [vmem:[%s460 + $0x40] sm:$0xff]
        %v1736 = vld [vmem:[%s460 + $0x48] sm:$0xff]
        %v1737 = vld [vmem:[%s460 + $0x50] sm:$0xff]
        %v1738 = vld [vmem:[%s460 + $0x58] sm:$0xff]
        %v1739 = vld [vmem:[%s460 + $0x60] sm:$0xff]
        %v1740 = vld [vmem:[%s460 + $0x68] sm:$0xff]
        %v1741 = vld [vmem:[%s460 + $0x70] sm:$0xff]
        %v1742 = vld [vmem:[%s460 + $0x78] sm:$0xff]
        %v1743 = vadd.f32 %v1711, %v1727
        %v1744 = vadd.f32 %v1712, %v1728
        %v1745 = vadd.f32 %v1713, %v1729
        %v1746 = vadd.f32 %v1714, %v1730
        %v1747 = vadd.f32 %v1715, %v1731
        %v1748 = vadd.f32 %v1716, %v1732
        %v1749 = vadd.f32 %v1717, %v1733
        %v1750 = vadd.f32 %v1718, %v1734
        %v1751 = vadd.f32 %v1719, %v1735
        %v1752 = vadd.f32 %v1720, %v1736
        %v1753 = vadd.f32 %v1721, %v1737
        %v1754 = vadd.f32 %v1722, %v1738
        %v1755 = vadd.f32 %v1723, %v1739
        %v1756 = vadd.f32 %v1724, %v1740
        %v1757 = vadd.f32 %v1725, %v1741
        %v1758 = vadd.f32 %v1726, %v1742
        %1759 = vst [vmem:[%s503] sm:$0xff] %v1743
        %1760 = vst [vmem:[%s503 + $0x8] sm:$0xff] %v1744
        %1761 = vst [vmem:[%s503 + $0x10] sm:$0xff] %v1745
        %1762 = vst [vmem:[%s503 + $0x18] sm:$0xff] %v1746
        %1763 = vst [vmem:[%s503 + $0x20] sm:$0xff] %v1747
        %1764 = vst [vmem:[%s503 + $0x28] sm:$0xff] %v1748
        %1765 = vst [vmem:[%s503 + $0x30] sm:$0xff] %v1749
        %1766 = vst [vmem:[%s503 + $0x38] sm:$0xff] %v1750
        %1767 = vst [vmem:[%s503 + $0x40] sm:$0xff] %v1751
        %1768 = vst [vmem:[%s503 + $0x48] sm:$0xff] %v1752
        %1769 = vst [vmem:[%s503 + $0x50] sm:$0xff] %v1753
        %1770 = vst [vmem:[%s503 + $0x58] sm:$0xff] %v1754
        %1771 = vst [vmem:[%s503 + $0x60] sm:$0xff] %v1755
        %1772 = vst [vmem:[%s503 + $0x68] sm:$0xff] %v1756
        %1773 = vst [vmem:[%s503 + $0x70] sm:$0xff] %v1757
        %1774 = vst [vmem:[%s503 + $0x78] sm:$0xff] %v1758
        %s1775 = sand.u32 %s295, 1
        %s1776 = scalar_lea.sflag [#allocation5], %s1775
        %s1777 = sand.u32 %s295, 1
        %s1778 = smul.addr %s1777, 128
        %s1779 = scalar_lea.vmem [#allocation12], %s1778
        // Predicated region
        $region93: #{tpu_custom_call.1} parent=63 // pred_check
          %p1780 = pneg %p305
        $region94: #{tpu_custom_call.1} parent=63 // pred_check_branch
          %1782 = sbr.rel (%p1780) target = $region96
        $region95: #{tpu_custom_call.1} parent=63 // pred_region
          %s1783 = smul.u32 16, %s35
          %s1785 = ssub.s32 2048, 2048
          %1786 = vsyncadd %s1776, %s1785
          %s1787 = smul.addr %s34, 32
          %s1788 = sadd.s32 %s1783, %s1787
          %s1789 = smul.addr %s1788, 128
          %s1790 = scalar_lea.hbm %s11, %s1789
          %s1791 = sshll.u32 %s1779, 4
          %s1792 = int_to_ptr.vmem [resolvable:$true] %s1791
          %1797 = dma.vmem_to_hbm [thread:$0]  %s1792, 2048, %s1790, %s1776, 128, 128, 8
        $region96: #{tpu_custom_call.1} parent=63 // pred_fallthru
          _
      $region64: #{tpu_custom_call.1} parent=5 // pred_fallthru
        _
      %p1798 = scmp.le.s32.totalorder 2, %s25
      // Predicated region
      $region97: #{tpu_custom_call.1} parent=5 // pred_check
        %p1799 = pneg %p1798
      $region98: #{tpu_custom_call.1} parent=5 // pred_check_branch
        %1801 = sbr.rel (%p1799) target = $region100
      $region99: #{tpu_custom_call.1} parent=5 // pred_region
        %s1802 = ssub.s32 %s25, 2
        // Predicated region
        $region101: #{tpu_custom_call.1} parent=99 // pred_check
          %p1803 = pneg %p311
        $region102: #{tpu_custom_call.1} parent=99 // pred_check_branch
          %1805 = sbr.rel (%p1803) target = $region104
        $region103: #{tpu_custom_call.1} parent=99 // pred_region
          %s1806 = sand.u32 %s296, 1
          %s1807 = scalar_lea.sflag [#allocation5], %s1806
          %s1808 = sand.u32 %s296, 1
          %s1809 = smul.addr %s1808, 128
          %s1810 = scalar_lea.vmem [#allocation12], %s1809
          %1811 = dma.done %s1807, 2048
        $region104: #{tpu_custom_call.1} parent=99 // pred_fallthru
          _
      $region100: #{tpu_custom_call.1} parent=5 // pred_fallthru
        _
    $region6: #{tpu_custom_call.1} parent=1 // loop_footer
      %s29 = sadd.s32 1, %s25
    $region7: #{tpu_custom_call.1} parent=1 // loop_footer_branch
      %24 = sbr.rel target = $region3
    $region8: #{tpu_custom_call.1} parent=1 // loop_exit
      _
    %1812 = vsyncpa [#allocation4], 1
    %s1813 = scalar_lea.sflag [#allocation4], 1
    %1814 = vsyncpa %s1813, 1
    %1815 = vsyncpa [#allocation7], 1
    %1816 = vsyncpa [#allocation10], 1
    %1817 = vsyncpa [#allocation5], 1
    %s1818 = scalar_lea.sflag [#allocation5], 1
    %1819 = vsyncpa %s1818, 1

</llo_original>
